<compile_context>
chip_gen: v7x
topology: tpu7x:2x2x1
jax: 0.10.0
libtpu: 0.0.40
codegen_flags: <defaults>
</compile_context>

<pallas_src>
import numpy as np
import jax
import jax.numpy as jnp
from jax import lax
from jax.experimental import pallas as pl
from jax.experimental.pallas import tpu as pltpu

H = 16
W = 16                      # H*W and W must be powers of two (index math uses shifts/masks)
HW = H * W
W_SHIFT = 4                 # log2(W)
HW_MASK = HW - 1
EPS = 1e-5                  # InstanceNorm eps (PyTorch default)
NEG_SLOPE = 0.01            # LeakyReLU negative_slope


def _lrelu(x):
    return jnp.where(x > 0, x, NEG_SLOPE * x)


def unet_res_block_kernel(x_ref, w1r_ref, w2_ref, prm_ref, o_ref, im_ref):
    # x_ref:   [Cin, LANES]       LANES = n_seg * HW (n_seg samples lane-concatenated)
    # w1r_ref: [2*Cout, 9*Cin]    bf16: conv1 taps (rows 0:Cout) + 1x1 conv3 at center tap
    # w2_ref:  [Cout, 9*Cout]     bf16: conv2 taps
    # prm_ref: [2*Cout, 4]        f32 cols: g1|g3, be1|be3, g2|1, be2|0
    # o_ref:   [Cout, LANES]
    # im_ref:  [9*Cout, LANES]    f32 VMEM scratch, shared im2col slab for both convs
    cin, lanes = x_ref.shape
    cout = o_ref.shape[0]
    n_seg = lanes // HW
    cb = max(cin, cout)

    x = x_ref[...]                                            # [Cin, LANES] f32

    # ---- border masks ("same" zero padding): built ONCE, pre-broadcast, reused ----
    # Per-sample spatial coords from the lane index; `& (HW-1)` keeps the global rolls
    # from leaking data across the sample boundary (those positions are masked to 0).
    p = lax.broadcasted_iota(jnp.int32, (1, lanes), 1)
    q = p & HW_MASK
    h_idx = q >> W_SHIFT
    w_idx = q & (W - 1)
    masks = {}
    for t in range(9):
        if t == 4:                                            # center tap: always valid
            continue
        sh, sw = t // 3 - 1, t % 3 - 1
        hh = h_idx + sh
        ww = w_idx + sw
        ok = (hh >= 0) & (hh < H) & (ww >= 0) & (ww < W)      # [1, LANES]
        mf = jnp.where(ok, 1.0, 0.0)                          # f32 multiplicative mask
        masks[t] = jnp.broadcast_to(mf, (cb, lanes))          # hoisted broadcast

    def fill_taps(inp, c):
        # im2col into the shared VMEM scratch: rows t*c:(t+1)*c hold tap t (shifted+masked).
        for t in range(9):
            if t == 4:
                tap = inp                                     # center: no roll, no mask
            else:
                sh, sw = t // 3 - 1, t % 3 - 1
                d = sh * W + sw                               # flattened spatial shift
                rolled = pltpu.roll(inp, shift=(-d) % lanes, axis=1)
                tap = rolled * masks[t][:c]
            im_ref[t * c:(t + 1) * c, :] = tap

    def inorm(v, gamma, beta):
        # InstanceNorm: per-channel stats over each sample's own HW lanes.
        outs = []
        for i in range(n_seg):
            vi = v[:, i * HW:(i + 1) * HW]
            mu = jnp.mean(vi, axis=1, keepdims=True)
            ms = jnp.mean(vi * vi, axis=1, keepdims=True)
            var = jnp.maximum(ms - mu * mu, 0.0)
            inv = lax.rsqrt(var + EPS)
            outs.append((vi - mu) * (inv * gamma) + beta)
        return outs[0] if n_seg == 1 else jnp.concatenate(outs, axis=1)

    # ---- conv1 (3x3) + residual 1x1 conv3 (center tap), fused: ONE bf16 MXU matmul ----
    # (pre-norm conv biases omitted: a per-channel constant cancels in InstanceNorm)
    fill_taps(x, cin)
    a1 = im_ref[: 9 * cin, :].astype(jnp.bfloat16)            # [9*Cin, LANES]
    y = jnp.dot(w1r_ref[...], a1, preferred_element_type=jnp.float32)   # [2*Cout, LANES]
    y = inorm(y, prm_ref[:, 0:1], prm_ref[:, 1:2])            # norm1 | norm3 (stacked)

    out1 = _lrelu(y[:cout])                                   # conv1 branch post-lrelu
    res = y[cout:]                                            # residual branch (no lrelu)

    # ---- conv2 (3x3): ONE bf16 MXU matmul, reusing masks and the scratch slab ----
    fill_taps(out1, cout)
    a2 = im_ref[...].astype(jnp.bfloat16)                     # [9*Cout, LANES]
    out2 = jnp.dot(w2_ref[...], a2, preferred_element_type=jnp.float32)
    out2 = inorm(out2, prm_ref[:cout, 2:3], prm_ref[:cout, 3:4])

    # out += residual ; lrelu
    o_ref[...] = _lrelu(out2 + res)


def unet_res_block(x_nchw, params, samples_per_step=None):
    N, Cin, Hh, Ww = x_nchw.shape
    assert (Hh, Ww) == (H, W)
    Cout = params["w1"].shape[0]

    # One grid step handles `sps` samples batched along the lane axis (amortizes the
    # ~0.35us/step grid overhead and widens the MXU lane dimension).  Default: all N in
    # one step (best on single-TensorCore v5e/v6e); on v7x pass samples_per_step=N//2 so
    # the two "parallel" grid steps land on both TensorCores.
    sps = N if samples_per_step is None else samples_per_step
    assert N % sps == 0
    n_steps = N // sps
    lanes = sps * HW

    # NCHW -> channel-major, samples concatenated along the flattened-spatial (lane) axis.
    x_lanes = jnp.transpose(x_nchw, (1, 0, 2, 3)).reshape(Cin, N * HW).astype(jnp.float32)

    def taps_flat(w):
        # [Co, Ci, 3, 3] -> lane-dense [Co, 9*Ci], column index = (kh*3+kw)*Ci + ci
        Co, Ci = w.shape[0], w.shape[1]
        return jnp.transpose(w, (0, 2, 3, 1)).reshape(Co, 9 * Ci).astype(jnp.float32)

    # Fused conv1 + residual 1x1 weight: [2*Cout, 9*Cin], bf16 for the MXU.
    w1_flat = taps_flat(params["w1"])                                    # [Cout, 9*Cin]
    w3_mat = params["w3"].reshape(Cout, Cin).astype(jnp.float32)
    w3_flat = jnp.zeros((Cout, 9 * Cin), jnp.float32)
    w3_flat = w3_flat.at[:, 4 * Cin:5 * Cin].set(w3_mat)                 # center tap (kh=kw=1)
    w1r = jnp.concatenate([w1_flat, w3_flat], axis=0).astype(jnp.bfloat16)
    w2_flat = taps_flat(params["w2"]).astype(jnp.bfloat16)               # [Cout, 9*Cout]

    # Per-channel affine params only (pre-norm conv biases dropped: no-ops under InstanceNorm).
    z = jnp.zeros((Cout,), jnp.float32)
    o = jnp.ones((Cout,), jnp.float32)
    prm = jnp.stack(
        [
            jnp.concatenate([params["g1"], params["g3"]]),
            jnp.concatenate([params["be1"], params["be3"]]),
            jnp.concatenate([params["g2"], o]),
            jnp.concatenate([params["be2"], z]),
        ],
        axis=1,
    ).astype(jnp.float32)                                                # [2*Cout, 4]

    flops = 2 * (2 * Cout * 9 * Cin + Cout * 9 * Cout) * HW * N
    bytes_accessed = (x_lanes.size * 4 + N * Cout * HW * 4
                      + w1r.size * 2 + w2_flat.size * 2 + prm.size * 4)

    out = pl.pallas_call(
        unet_res_block_kernel,
        out_shape=jax.ShapeDtypeStruct((Cout, N * HW), jnp.float32),
        grid=(n_steps,),
        in_specs=[
            pl.BlockSpec((Cin, lanes), lambda n: (0, n)),
            pl.BlockSpec((2 * Cout, 9 * Cin), lambda n: (0, 0)),
            pl.BlockSpec((Cout, 9 * Cout), lambda n: (0, 0)),
            pl.BlockSpec((2 * Cout, 4), lambda n: (0, 0)),
        ],
        out_specs=pl.BlockSpec((Cout, lanes), lambda n: (0, n)),
        scratch_shapes=[pltpu.VMEM((9 * Cout, lanes), jnp.float32)],
        compiler_params=pltpu.CompilerParams(dimension_semantics=("parallel",)),
        cost_estimate=pl.CostEstimate(flops=flops, transcendentals=3 * Cout * N,
                                      bytes_accessed=bytes_accessed),
    )(x_lanes, w1r, w2_flat, prm)

    # [Cout, N*HW] -> [N, Cout, H, W]
    return jnp.transpose(out.reshape(Cout, N, HW), (1, 0, 2)).reshape(N, Cout, H, W)


def reference(x, p):
    """Pure-JAX reference mirroring the PyTorch forward (NCHW), biases included."""
    def conv(x, w, b, pad):
        y = lax.conv_general_dilated(
            x, w, window_strides=(1, 1), padding=[(pad, pad), (pad, pad)],
            dimension_numbers=("NCHW", "OIHW", "NCHW"))
        return y + b[None, :, None, None]

    def inorm(x, g, b):
        mu = x.mean(axis=(2, 3), keepdims=True)
        var = ((x - mu) ** 2).mean(axis=(2, 3), keepdims=True)
        return (x - mu) * lax.rsqrt(var + EPS) * g[None, :, None, None] + b[None, :, None, None]

    lrelu = lambda v: jnp.where(v > 0, v, NEG_SLOPE * v)
    out = lrelu(inorm(conv(x, p["w1"], p["b1"], 1), p["g1"], p["be1"]))
    out = inorm(conv(out, p["w2"], p["b2"], 1), p["g2"], p["be2"])
    res = inorm(conv(x, p["w3"], p["b3"], 0), p["g3"], p["be3"])
    return lrelu(out + res)


if __name__ == "__main__":
    key = jax.random.PRNGKey(0)
    N, Cin, Cout = 2, 8, 16
    ks = jax.random.split(key, 16)

    params = {
        "w1": 0.1 * jax.random.normal(ks[0], (Cout, Cin, 3, 3), jnp.float32),
        "b1": 0.1 * jax.random.normal(ks[1], (Cout,), jnp.float32),
        "g1": 1.0 + 0.1 * jax.random.normal(ks[2], (Cout,), jnp.float32),
        "be1": 0.1 * jax.random.normal(ks[3], (Cout,), jnp.float32),
        "w2": 0.1 * jax.random.normal(ks[4], (Cout, Cout, 3, 3), jnp.float32),
        "b2": 0.1 * jax.random.normal(ks[5], (Cout,), jnp.float32),
        "g2": 1.0 + 0.1 * jax.random.normal(ks[6], (Cout,), jnp.float32),
        "be2": 0.1 * jax.random.normal(ks[7], (Cout,), jnp.float32),
        "w3": 0.1 * jax.random.normal(ks[8], (Cout, Cin, 1, 1), jnp.float32),
        "b3": 0.1 * jax.random.normal(ks[9], (Cout,), jnp.float32),
        "g3": 1.0 + 0.1 * jax.random.normal(ks[10], (Cout,), jnp.float32),
        "be3": 0.1 * jax.random.normal(ks[11], (Cout,), jnp.float32),
    }
    x = jax.random.normal(ks[15], (N, Cin, H, W), jnp.float32)

    y = unet_res_block(x, params)
    y = jax.block_until_ready(y)

    y_ref = reference(x, params)
    np.testing.assert_allclose(np.asarray(y), np.asarray(y_ref), atol=5e-2, rtol=5e-2)

    print("KERNEL_OK")
</pallas_src>

<mosaic_0001>
module attributes {stable_mosaic.version = 11 : i64} {
  func.func @unet_res_block_kernel(%arg0: i32, %arg1: memref<8x512xf32, #tpu.memory_space<vmem>>, %arg2: memref<32x72xbf16, #tpu.memory_space<vmem>>, %arg3: memref<16x144xbf16, #tpu.memory_space<vmem>>, %arg4: memref<32x4xf32, #tpu.memory_space<vmem>>, %arg5: memref<16x512xf32, #tpu.memory_space<vmem>>, %arg6: memref<144x512xf32, #tpu.memory_space<vmem>>) attributes {dimension_semantics = [#tpu.dimension_semantics<parallel>], iteration_bounds = array<i64: 1>, scalar_prefetch = 0 : i64, scratch_operands = 1 : i64, tpu.core_type = #tpu.core_type<tc>, window_params = [{transform_indices = @transform_0, window_bounds = array<i64: 8, 512>}, {pipeline_mode = #tpu.pipeline_mode<synchronous>, transform_indices = @transform_1, window_bounds = array<i64: 32, 72>}, {pipeline_mode = #tpu.pipeline_mode<synchronous>, transform_indices = @transform_2, window_bounds = array<i64: 16, 144>}, {pipeline_mode = #tpu.pipeline_mode<synchronous>, transform_indices = @transform_3, window_bounds = array<i64: 32, 4>}, {transform_indices = @transform_4, window_bounds = array<i64: 16, 512>}]} {
    %c0 = arith.constant 0 : index
    %c0_0 = arith.constant 0 : index
    %0 = vector.load %arg1[%c0, %c0_0] : memref<8x512xf32, #tpu.memory_space<vmem>>, vector<8x512xf32>
    %1 = tpu.iota {dimensions = array<i32: 1>} : vector<1x512xi32>
    %c255_i32 = arith.constant 255 : i32
    %2 = vector.broadcast %c255_i32 : i32 to vector<1x512xi32>
    %3 = arith.andi %1, %2 : vector<1x512xi32>
    %c4_i32 = arith.constant 4 : i32
    %4 = vector.broadcast %c4_i32 : i32 to vector<1x512xi32>
    %5 = arith.shrsi %3, %4 : vector<1x512xi32>
    %c15_i32 = arith.constant 15 : i32
    %6 = vector.broadcast %c15_i32 : i32 to vector<1x512xi32>
    %7 = arith.andi %3, %6 : vector<1x512xi32>
    %c-1_i32 = arith.constant -1 : i32
    %8 = vector.broadcast %c-1_i32 : i32 to vector<1x512xi32>
    %9 = arith.addi %5, %8 : vector<1x512xi32>
    %c-1_i32_1 = arith.constant -1 : i32
    %10 = vector.broadcast %c-1_i32_1 : i32 to vector<1x512xi32>
    %11 = arith.addi %7, %10 : vector<1x512xi32>
    %c0_i32 = arith.constant 0 : i32
    %12 = vector.broadcast %c0_i32 : i32 to vector<1x512xi32>
    %13 = arith.cmpi sge, %9, %12 : vector<1x512xi32>
    %c16_i32 = arith.constant 16 : i32
    %14 = vector.broadcast %c16_i32 : i32 to vector<1x512xi32>
    %15 = arith.cmpi slt, %9, %14 : vector<1x512xi32>
    %16 = arith.andi %13, %15 : vector<1x512xi1>
    %c0_i32_2 = arith.constant 0 : i32
    %17 = vector.broadcast %c0_i32_2 : i32 to vector<1x512xi32>
    %18 = arith.cmpi sge, %11, %17 : vector<1x512xi32>
    %19 = arith.andi %16, %18 : vector<1x512xi1>
    %c16_i32_3 = arith.constant 16 : i32
    %20 = vector.broadcast %c16_i32_3 : i32 to vector<1x512xi32>
    %21 = arith.cmpi slt, %11, %20 : vector<1x512xi32>
    %22 = arith.andi %19, %21 : vector<1x512xi1>
    %cst = arith.constant 1.000000e+00 : f32
    %cst_4 = arith.constant 0.000000e+00 : f32
    %23 = vector.broadcast %cst : f32 to vector<1x512xf32>
    %24 = vector.broadcast %cst_4 : f32 to vector<1x512xf32>
    %25 = arith.select %22, %23, %24 : vector<1x512xi1>, vector<1x512xf32>
    %26 = vector.shape_cast %25 : vector<1x512xf32> to vector<1x512xf32>
    %27 = vector.broadcast %26 : vector<1x512xf32> to vector<16x512xf32>
    %c-1_i32_5 = arith.constant -1 : i32
    %28 = vector.broadcast %c-1_i32_5 : i32 to vector<1x512xi32>
    %29 = arith.addi %5, %28 : vector<1x512xi32>
    %c0_i32_6 = arith.constant 0 : i32
    %30 = vector.broadcast %c0_i32_6 : i32 to vector<1x512xi32>
    %31 = arith.addi %7, %30 : vector<1x512xi32>
    %c0_i32_7 = arith.constant 0 : i32
    %32 = vector.broadcast %c0_i32_7 : i32 to vector<1x512xi32>
    %33 = arith.cmpi sge, %29, %32 : vector<1x512xi32>
    %c16_i32_8 = arith.constant 16 : i32
    %34 = vector.broadcast %c16_i32_8 : i32 to vector<1x512xi32>
    %35 = arith.cmpi slt, %29, %34 : vector<1x512xi32>
    %36 = arith.andi %33, %35 : vector<1x512xi1>
    %c0_i32_9 = arith.constant 0 : i32
    %37 = vector.broadcast %c0_i32_9 : i32 to vector<1x512xi32>
    %38 = arith.cmpi sge, %31, %37 : vector<1x512xi32>
    %39 = arith.andi %36, %38 : vector<1x512xi1>
    %c16_i32_10 = arith.constant 16 : i32
    %40 = vector.broadcast %c16_i32_10 : i32 to vector<1x512xi32>
    %41 = arith.cmpi slt, %31, %40 : vector<1x512xi32>
    %42 = arith.andi %39, %41 : vector<1x512xi1>
    %cst_11 = arith.constant 1.000000e+00 : f32
    %cst_12 = arith.constant 0.000000e+00 : f32
    %43 = vector.broadcast %cst_11 : f32 to vector<1x512xf32>
    %44 = vector.broadcast %cst_12 : f32 to vector<1x512xf32>
    %45 = arith.select %42, %43, %44 : vector<1x512xi1>, vector<1x512xf32>
    %46 = vector.shape_cast %45 : vector<1x512xf32> to vector<1x512xf32>
    %47 = vector.broadcast %46 : vector<1x512xf32> to vector<16x512xf32>
    %c-1_i32_13 = arith.constant -1 : i32
    %48 = vector.broadcast %c-1_i32_13 : i32 to vector<1x512xi32>
    %49 = arith.addi %5, %48 : vector<1x512xi32>
    %c1_i32 = arith.constant 1 : i32
    %50 = vector.broadcast %c1_i32 : i32 to vector<1x512xi32>
    %51 = arith.addi %7, %50 : vector<1x512xi32>
    %c0_i32_14 = arith.constant 0 : i32
    %52 = vector.broadcast %c0_i32_14 : i32 to vector<1x512xi32>
    %53 = arith.cmpi sge, %49, %52 : vector<1x512xi32>
    %c16_i32_15 = arith.constant 16 : i32
    %54 = vector.broadcast %c16_i32_15 : i32 to vector<1x512xi32>
    %55 = arith.cmpi slt, %49, %54 : vector<1x512xi32>
    %56 = arith.andi %53, %55 : vector<1x512xi1>
    %c0_i32_16 = arith.constant 0 : i32
    %57 = vector.broadcast %c0_i32_16 : i32 to vector<1x512xi32>
    %58 = arith.cmpi sge, %51, %57 : vector<1x512xi32>
    %59 = arith.andi %56, %58 : vector<1x512xi1>
    %c16_i32_17 = arith.constant 16 : i32
    %60 = vector.broadcast %c16_i32_17 : i32 to vector<1x512xi32>
    %61 = arith.cmpi slt, %51, %60 : vector<1x512xi32>
    %62 = arith.andi %59, %61 : vector<1x512xi1>
    %cst_18 = arith.constant 1.000000e+00 : f32
    %cst_19 = arith.constant 0.000000e+00 : f32
    %63 = vector.broadcast %cst_18 : f32 to vector<1x512xf32>
    %64 = vector.broadcast %cst_19 : f32 to vector<1x512xf32>
    %65 = arith.select %62, %63, %64 : vector<1x512xi1>, vector<1x512xf32>
    %66 = vector.shape_cast %65 : vector<1x512xf32> to vector<1x512xf32>
    %67 = vector.broadcast %66 : vector<1x512xf32> to vector<16x512xf32>
    %c0_i32_20 = arith.constant 0 : i32
    %68 = vector.broadcast %c0_i32_20 : i32 to vector<1x512xi32>
    %69 = arith.addi %5, %68 : vector<1x512xi32>
    %c-1_i32_21 = arith.constant -1 : i32
    %70 = vector.broadcast %c-1_i32_21 : i32 to vector<1x512xi32>
    %71 = arith.addi %7, %70 : vector<1x512xi32>
    %c0_i32_22 = arith.constant 0 : i32
    %72 = vector.broadcast %c0_i32_22 : i32 to vector<1x512xi32>
    %73 = arith.cmpi sge, %69, %72 : vector<1x512xi32>
    %c16_i32_23 = arith.constant 16 : i32
    %74 = vector.broadcast %c16_i32_23 : i32 to vector<1x512xi32>
    %75 = arith.cmpi slt, %69, %74 : vector<1x512xi32>
    %76 = arith.andi %73, %75 : vector<1x512xi1>
    %c0_i32_24 = arith.constant 0 : i32
    %77 = vector.broadcast %c0_i32_24 : i32 to vector<1x512xi32>
    %78 = arith.cmpi sge, %71, %77 : vector<1x512xi32>
    %79 = arith.andi %76, %78 : vector<1x512xi1>
    %c16_i32_25 = arith.constant 16 : i32
    %80 = vector.broadcast %c16_i32_25 : i32 to vector<1x512xi32>
    %81 = arith.cmpi slt, %71, %80 : vector<1x512xi32>
    %82 = arith.andi %79, %81 : vector<1x512xi1>
    %cst_26 = arith.constant 1.000000e+00 : f32
    %cst_27 = arith.constant 0.000000e+00 : f32
    %83 = vector.broadcast %cst_26 : f32 to vector<1x512xf32>
    %84 = vector.broadcast %cst_27 : f32 to vector<1x512xf32>
    %85 = arith.select %82, %83, %84 : vector<1x512xi1>, vector<1x512xf32>
    %86 = vector.shape_cast %85 : vector<1x512xf32> to vector<1x512xf32>
    %87 = vector.broadcast %86 : vector<1x512xf32> to vector<16x512xf32>
    %c0_i32_28 = arith.constant 0 : i32
    %88 = vector.broadcast %c0_i32_28 : i32 to vector<1x512xi32>
    %89 = arith.addi %5, %88 : vector<1x512xi32>
    %c1_i32_29 = arith.constant 1 : i32
    %90 = vector.broadcast %c1_i32_29 : i32 to vector<1x512xi32>
    %91 = arith.addi %7, %90 : vector<1x512xi32>
    %c0_i32_30 = arith.constant 0 : i32
    %92 = vector.broadcast %c0_i32_30 : i32 to vector<1x512xi32>
    %93 = arith.cmpi sge, %89, %92 : vector<1x512xi32>
    %c16_i32_31 = arith.constant 16 : i32
    %94 = vector.broadcast %c16_i32_31 : i32 to vector<1x512xi32>
    %95 = arith.cmpi slt, %89, %94 : vector<1x512xi32>
    %96 = arith.andi %93, %95 : vector<1x512xi1>
    %c0_i32_32 = arith.constant 0 : i32
    %97 = vector.broadcast %c0_i32_32 : i32 to vector<1x512xi32>
    %98 = arith.cmpi sge, %91, %97 : vector<1x512xi32>
    %99 = arith.andi %96, %98 : vector<1x512xi1>
    %c16_i32_33 = arith.constant 16 : i32
    %100 = vector.broadcast %c16_i32_33 : i32 to vector<1x512xi32>
    %101 = arith.cmpi slt, %91, %100 : vector<1x512xi32>
    %102 = arith.andi %99, %101 : vector<1x512xi1>
    %cst_34 = arith.constant 1.000000e+00 : f32
    %cst_35 = arith.constant 0.000000e+00 : f32
    %103 = vector.broadcast %cst_34 : f32 to vector<1x512xf32>
    %104 = vector.broadcast %cst_35 : f32 to vector<1x512xf32>
    %105 = arith.select %102, %103, %104 : vector<1x512xi1>, vector<1x512xf32>
    %106 = vector.shape_cast %105 : vector<1x512xf32> to vector<1x512xf32>
    %107 = vector.broadcast %106 : vector<1x512xf32> to vector<16x512xf32>
    %c1_i32_36 = arith.constant 1 : i32
    %108 = vector.broadcast %c1_i32_36 : i32 to vector<1x512xi32>
    %109 = arith.addi %5, %108 : vector<1x512xi32>
    %c-1_i32_37 = arith.constant -1 : i32
    %110 = vector.broadcast %c-1_i32_37 : i32 to vector<1x512xi32>
    %111 = arith.addi %7, %110 : vector<1x512xi32>
    %c0_i32_38 = arith.constant 0 : i32
    %112 = vector.broadcast %c0_i32_38 : i32 to vector<1x512xi32>
    %113 = arith.cmpi sge, %109, %112 : vector<1x512xi32>
    %c16_i32_39 = arith.constant 16 : i32
    %114 = vector.broadcast %c16_i32_39 : i32 to vector<1x512xi32>
    %115 = arith.cmpi slt, %109, %114 : vector<1x512xi32>
    %116 = arith.andi %113, %115 : vector<1x512xi1>
    %c0_i32_40 = arith.constant 0 : i32
    %117 = vector.broadcast %c0_i32_40 : i32 to vector<1x512xi32>
    %118 = arith.cmpi sge, %111, %117 : vector<1x512xi32>
    %119 = arith.andi %116, %118 : vector<1x512xi1>
    %c16_i32_41 = arith.constant 16 : i32
    %120 = vector.broadcast %c16_i32_41 : i32 to vector<1x512xi32>
    %121 = arith.cmpi slt, %111, %120 : vector<1x512xi32>
    %122 = arith.andi %119, %121 : vector<1x512xi1>
    %cst_42 = arith.constant 1.000000e+00 : f32
    %cst_43 = arith.constant 0.000000e+00 : f32
    %123 = vector.broadcast %cst_42 : f32 to vector<1x512xf32>
    %124 = vector.broadcast %cst_43 : f32 to vector<1x512xf32>
    %125 = arith.select %122, %123, %124 : vector<1x512xi1>, vector<1x512xf32>
    %126 = vector.shape_cast %125 : vector<1x512xf32> to vector<1x512xf32>
    %127 = vector.broadcast %126 : vector<1x512xf32> to vector<16x512xf32>
    %c1_i32_44 = arith.constant 1 : i32
    %128 = vector.broadcast %c1_i32_44 : i32 to vector<1x512xi32>
    %129 = arith.addi %5, %128 : vector<1x512xi32>
    %c0_i32_45 = arith.constant 0 : i32
    %130 = vector.broadcast %c0_i32_45 : i32 to vector<1x512xi32>
    %131 = arith.addi %7, %130 : vector<1x512xi32>
    %c0_i32_46 = arith.constant 0 : i32
    %132 = vector.broadcast %c0_i32_46 : i32 to vector<1x512xi32>
    %133 = arith.cmpi sge, %129, %132 : vector<1x512xi32>
    %c16_i32_47 = arith.constant 16 : i32
    %134 = vector.broadcast %c16_i32_47 : i32 to vector<1x512xi32>
    %135 = arith.cmpi slt, %129, %134 : vector<1x512xi32>
    %136 = arith.andi %133, %135 : vector<1x512xi1>
    %c0_i32_48 = arith.constant 0 : i32
    %137 = vector.broadcast %c0_i32_48 : i32 to vector<1x512xi32>
    %138 = arith.cmpi sge, %131, %137 : vector<1x512xi32>
    %139 = arith.andi %136, %138 : vector<1x512xi1>
    %c16_i32_49 = arith.constant 16 : i32
    %140 = vector.broadcast %c16_i32_49 : i32 to vector<1x512xi32>
    %141 = arith.cmpi slt, %131, %140 : vector<1x512xi32>
    %142 = arith.andi %139, %141 : vector<1x512xi1>
    %cst_50 = arith.constant 1.000000e+00 : f32
    %cst_51 = arith.constant 0.000000e+00 : f32
    %143 = vector.broadcast %cst_50 : f32 to vector<1x512xf32>
    %144 = vector.broadcast %cst_51 : f32 to vector<1x512xf32>
    %145 = arith.select %142, %143, %144 : vector<1x512xi1>, vector<1x512xf32>
    %146 = vector.shape_cast %145 : vector<1x512xf32> to vector<1x512xf32>
    %147 = vector.broadcast %146 : vector<1x512xf32> to vector<16x512xf32>
    %c1_i32_52 = arith.constant 1 : i32
    %148 = vector.broadcast %c1_i32_52 : i32 to vector<1x512xi32>
    %149 = arith.addi %5, %148 : vector<1x512xi32>
    %c1_i32_53 = arith.constant 1 : i32
    %150 = vector.broadcast %c1_i32_53 : i32 to vector<1x512xi32>
    %151 = arith.addi %7, %150 : vector<1x512xi32>
    %c0_i32_54 = arith.constant 0 : i32
    %152 = vector.broadcast %c0_i32_54 : i32 to vector<1x512xi32>
    %153 = arith.cmpi sge, %149, %152 : vector<1x512xi32>
    %c16_i32_55 = arith.constant 16 : i32
    %154 = vector.broadcast %c16_i32_55 : i32 to vector<1x512xi32>
    %155 = arith.cmpi slt, %149, %154 : vector<1x512xi32>
    %156 = arith.andi %153, %155 : vector<1x512xi1>
    %c0_i32_56 = arith.constant 0 : i32
    %157 = vector.broadcast %c0_i32_56 : i32 to vector<1x512xi32>
    %158 = arith.cmpi sge, %151, %157 : vector<1x512xi32>
    %159 = arith.andi %156, %158 : vector<1x512xi1>
    %c16_i32_57 = arith.constant 16 : i32
    %160 = vector.broadcast %c16_i32_57 : i32 to vector<1x512xi32>
    %161 = arith.cmpi slt, %151, %160 : vector<1x512xi32>
    %162 = arith.andi %159, %161 : vector<1x512xi1>
    %cst_58 = arith.constant 1.000000e+00 : f32
    %cst_59 = arith.constant 0.000000e+00 : f32
    %163 = vector.broadcast %cst_58 : f32 to vector<1x512xf32>
    %164 = vector.broadcast %cst_59 : f32 to vector<1x512xf32>
    %165 = arith.select %162, %163, %164 : vector<1x512xi1>, vector<1x512xf32>
    %166 = vector.shape_cast %165 : vector<1x512xf32> to vector<1x512xf32>
    %167 = vector.broadcast %166 : vector<1x512xf32> to vector<16x512xf32>
    %c17_i32 = arith.constant 17 : i32
    %168 = tpu.dynamic_rotate %0 by %c17_i32 dim 1 : vector<8x512xf32>, i32 -> vector<8x512xf32>
    %169 = vector.extract_strided_slice %27 {offsets = [0, 0], sizes = [8, 512], strides = [1, 1]} : vector<16x512xf32> to vector<8x512xf32>
    %170 = arith.mulf %168, %169 : vector<8x512xf32>
    %c0_60 = arith.constant 0 : index
    %c0_61 = arith.constant 0 : index
    %171 = vector.load %arg6[%c0_60, %c0_61] : memref<144x512xf32, #tpu.memory_space<vmem>>, vector<8x512xf32>
    tpu.vector_store %arg6[%c0_60, %c0_61], %170 {strides = array<i32>} : memref<144x512xf32, #tpu.memory_space<vmem>>, vector<8x512xf32>,
    %c16_i32_62 = arith.constant 16 : i32
    %172 = tpu.dynamic_rotate %0 by %c16_i32_62 dim 1 : vector<8x512xf32>, i32 -> vector<8x512xf32>
    %173 = vector.extract_strided_slice %47 {offsets = [0, 0], sizes = [8, 512], strides = [1, 1]} : vector<16x512xf32> to vector<8x512xf32>
    %174 = arith.mulf %172, %173 : vector<8x512xf32>
    %c8 = arith.constant 8 : index
    %c0_63 = arith.constant 0 : index
    %175 = vector.load %arg6[%c8, %c0_63] : memref<144x512xf32, #tpu.memory_space<vmem>>, vector<8x512xf32>
    tpu.vector_store %arg6[%c8, %c0_63], %174 {strides = array<i32>} : memref<144x512xf32, #tpu.memory_space<vmem>>, vector<8x512xf32>,
    %c15_i32_64 = arith.constant 15 : i32
    %176 = tpu.dynamic_rotate %0 by %c15_i32_64 dim 1 : vector<8x512xf32>, i32 -> vector<8x512xf32>
    %177 = vector.extract_strided_slice %67 {offsets = [0, 0], sizes = [8, 512], strides = [1, 1]} : vector<16x512xf32> to vector<8x512xf32>
    %178 = arith.mulf %176, %177 : vector<8x512xf32>
    %c16 = arith.constant 16 : index
    %c0_65 = arith.constant 0 : index
    %179 = vector.load %arg6[%c16, %c0_65] : memref<144x512xf32, #tpu.memory_space<vmem>>, vector<8x512xf32>
    tpu.vector_store %arg6[%c16, %c0_65], %178 {strides = array<i32>} : memref<144x512xf32, #tpu.memory_space<vmem>>, vector<8x512xf32>,
    %c1_i32_66 = arith.constant 1 : i32
    %180 = tpu.dynamic_rotate %0 by %c1_i32_66 dim 1 : vector<8x512xf32>, i32 -> vector<8x512xf32>
    %181 = vector.extract_strided_slice %87 {offsets = [0, 0], sizes = [8, 512], strides = [1, 1]} : vector<16x512xf32> to vector<8x512xf32>
    %182 = arith.mulf %180, %181 : vector<8x512xf32>
    %c24 = arith.constant 24 : index
    %c0_67 = arith.constant 0 : index
    %183 = vector.load %arg6[%c24, %c0_67] : memref<144x512xf32, #tpu.memory_space<vmem>>, vector<8x512xf32>
    tpu.vector_store %arg6[%c24, %c0_67], %182 {strides = array<i32>} : memref<144x512xf32, #tpu.memory_space<vmem>>, vector<8x512xf32>,
    %c32 = arith.constant 32 : index
    %c0_68 = arith.constant 0 : index
    %184 = vector.load %arg6[%c32, %c0_68] : memref<144x512xf32, #tpu.memory_space<vmem>>, vector<8x512xf32>
    tpu.vector_store %arg6[%c32, %c0_68], %0 {strides = array<i32>} : memref<144x512xf32, #tpu.memory_space<vmem>>, vector<8x512xf32>,
    %c511_i32 = arith.constant 511 : i32
    %185 = tpu.dynamic_rotate %0 by %c511_i32 dim 1 : vector<8x512xf32>, i32 -> vector<8x512xf32>
    %186 = vector.extract_strided_slice %107 {offsets = [0, 0], sizes = [8, 512], strides = [1, 1]} : vector<16x512xf32> to vector<8x512xf32>
    %187 = arith.mulf %185, %186 : vector<8x512xf32>
    %c40 = arith.constant 40 : index
    %c0_69 = arith.constant 0 : index
    %188 = vector.load %arg6[%c40, %c0_69] : memref<144x512xf32, #tpu.memory_space<vmem>>, vector<8x512xf32>
    tpu.vector_store %arg6[%c40, %c0_69], %187 {strides = array<i32>} : memref<144x512xf32, #tpu.memory_space<vmem>>, vector<8x512xf32>,
    %c497_i32 = arith.constant 497 : i32
    %189 = tpu.dynamic_rotate %0 by %c497_i32 dim 1 : vector<8x512xf32>, i32 -> vector<8x512xf32>
    %190 = vector.extract_strided_slice %127 {offsets = [0, 0], sizes = [8, 512], strides = [1, 1]} : vector<16x512xf32> to vector<8x512xf32>
    %191 = arith.mulf %189, %190 : vector<8x512xf32>
    %c48 = arith.constant 48 : index
    %c0_70 = arith.constant 0 : index
    %192 = vector.load %arg6[%c48, %c0_70] : memref<144x512xf32, #tpu.memory_space<vmem>>, vector<8x512xf32>
    tpu.vector_store %arg6[%c48, %c0_70], %191 {strides = array<i32>} : memref<144x512xf32, #tpu.memory_space<vmem>>, vector<8x512xf32>,
    %c496_i32 = arith.constant 496 : i32
    %193 = tpu.dynamic_rotate %0 by %c496_i32 dim 1 : vector<8x512xf32>, i32 -> vector<8x512xf32>
    %194 = vector.extract_strided_slice %147 {offsets = [0, 0], sizes = [8, 512], strides = [1, 1]} : vector<16x512xf32> to vector<8x512xf32>
    %195 = arith.mulf %193, %194 : vector<8x512xf32>
    %c56 = arith.constant 56 : index
    %c0_71 = arith.constant 0 : index
    %196 = vector.load %arg6[%c56, %c0_71] : memref<144x512xf32, #tpu.memory_space<vmem>>, vector<8x512xf32>
    tpu.vector_store %arg6[%c56, %c0_71], %195 {strides = array<i32>} : memref<144x512xf32, #tpu.memory_space<vmem>>, vector<8x512xf32>,
    %c495_i32 = arith.constant 495 : i32
    %197 = tpu.dynamic_rotate %0 by %c495_i32 dim 1 : vector<8x512xf32>, i32 -> vector<8x512xf32>
    %198 = vector.extract_strided_slice %167 {offsets = [0, 0], sizes = [8, 512], strides = [1, 1]} : vector<16x512xf32> to vector<8x512xf32>
    %199 = arith.mulf %197, %198 : vector<8x512xf32>
    %c64 = arith.constant 64 : index
    %c0_72 = arith.constant 0 : index
    %200 = vector.load %arg6[%c64, %c0_72] : memref<144x512xf32, #tpu.memory_space<vmem>>, vector<8x512xf32>
    tpu.vector_store %arg6[%c64, %c0_72], %199 {strides = array<i32>} : memref<144x512xf32, #tpu.memory_space<vmem>>, vector<8x512xf32>,
    %c0_73 = arith.constant 0 : index
    %c0_74 = arith.constant 0 : index
    %201 = vector.load %arg6[%c0_73, %c0_74] : memref<144x512xf32, #tpu.memory_space<vmem>>, vector<72x512xf32>
    %202 = arith.truncf %201 : vector<72x512xf32> to vector<72x512xbf16>
    %c0_75 = arith.constant 0 : index
    %c0_76 = arith.constant 0 : index
    %203 = vector.load %arg2[%c0_75, %c0_76] : memref<32x72xbf16, #tpu.memory_space<vmem>>, vector<32x72xbf16>
    %cst_77 = arith.constant dense<0.000000e+00> : vector<32x512xf32>
    %204 = tpu.matmul %203, %202, %cst_77 {dimension_numbers = #tpu.dot_dimension_numbers<[1], [0], [0], [1], [0, 0, 1, 1], [], []>} : vector<32x72xbf16>, vector<72x512xbf16>, vector<32x512xf32> -> vector<32x512xf32>
    %c0_78 = arith.constant 0 : index
    %c0_79 = arith.constant 0 : index
    %205 = vector.load %arg4[%c0_78, %c0_79] : memref<32x4xf32, #tpu.memory_space<vmem>>, vector<32x1xf32>
    %c0_80 = arith.constant 0 : index
    %c1 = arith.constant 1 : index
    %206 = vector.load %arg4[%c0_80, %c1] : memref<32x4xf32, #tpu.memory_space<vmem>>, vector<32x1xf32>
    %207 = vector.extract_strided_slice %204 {offsets = [0, 0], sizes = [32, 256], strides = [1, 1]} : vector<32x512xf32> to vector<32x256xf32>
    %cst_81 = arith.constant dense<0.000000e+00> : vector<32xf32>
    %208 = vector.multi_reduction <add>, %207, %cst_81 [1] : vector<32x256xf32> to vector<32xf32>
    %209 = vector.shape_cast %208 : vector<32xf32> to vector<32x1xf32>
    %cst_82 = arith.constant 2.560000e+02 : f32
    %210 = vector.broadcast %cst_82 : f32 to vector<32x1xf32>
    %211 = arith.divf %209, %210 : vector<32x1xf32>
    %212 = arith.mulf %207, %207 : vector<32x256xf32>
    %cst_83 = arith.constant dense<0.000000e+00> : vector<32xf32>
    %213 = vector.multi_reduction <add>, %212, %cst_83 [1] : vector<32x256xf32> to vector<32xf32>
    %214 = vector.shape_cast %213 : vector<32xf32> to vector<32x1xf32>
    %cst_84 = arith.constant 2.560000e+02 : f32
    %215 = vector.broadcast %cst_84 : f32 to vector<32x1xf32>
    %216 = arith.divf %214, %215 : vector<32x1xf32>
    %217 = arith.mulf %211, %211 : vector<32x1xf32>
    %218 = arith.subf %216, %217 : vector<32x1xf32>
    %cst_85 = arith.constant 0.000000e+00 : f32
    %219 = vector.broadcast %cst_85 : f32 to vector<32x1xf32>
    %220 = arith.maximumf %218, %219 : vector<32x1xf32>
    %cst_86 = arith.constant 9.99999974E-6 : f32
    %221 = vector.broadcast %cst_86 : f32 to vector<32x1xf32>
    %222 = arith.addf %220, %221 : vector<32x1xf32>
    %223 = math.rsqrt %222 : vector<32x1xf32>
    %224 = vector.broadcast %211 : vector<32x1xf32> to vector<32x256xf32>
    %225 = arith.subf %207, %224 : vector<32x256xf32>
    %226 = arith.mulf %223, %205 : vector<32x1xf32>
    %227 = vector.broadcast %226 : vector<32x1xf32> to vector<32x256xf32>
    %228 = arith.mulf %225, %227 : vector<32x256xf32>
    %229 = vector.broadcast %206 : vector<32x1xf32> to vector<32x256xf32>
    %230 = arith.addf %228, %229 : vector<32x256xf32>
    %231 = vector.extract_strided_slice %204 {offsets = [0, 256], sizes = [32, 256], strides = [1, 1]} : vector<32x512xf32> to vector<32x256xf32>
    %cst_87 = arith.constant dense<0.000000e+00> : vector<32xf32>
    %232 = vector.multi_reduction <add>, %231, %cst_87 [1] : vector<32x256xf32> to vector<32xf32>
    %233 = vector.shape_cast %232 : vector<32xf32> to vector<32x1xf32>
    %cst_88 = arith.constant 2.560000e+02 : f32
    %234 = vector.broadcast %cst_88 : f32 to vector<32x1xf32>
    %235 = arith.divf %233, %234 : vector<32x1xf32>
    %236 = arith.mulf %231, %231 : vector<32x256xf32>
    %cst_89 = arith.constant dense<0.000000e+00> : vector<32xf32>
    %237 = vector.multi_reduction <add>, %236, %cst_89 [1] : vector<32x256xf32> to vector<32xf32>
    %238 = vector.shape_cast %237 : vector<32xf32> to vector<32x1xf32>
    %cst_90 = arith.constant 2.560000e+02 : f32
    %239 = vector.broadcast %cst_90 : f32 to vector<32x1xf32>
    %240 = arith.divf %238, %239 : vector<32x1xf32>
    %241 = arith.mulf %235, %235 : vector<32x1xf32>
    %242 = arith.subf %240, %241 : vector<32x1xf32>
    %cst_91 = arith.constant 0.000000e+00 : f32
    %243 = vector.broadcast %cst_91 : f32 to vector<32x1xf32>
    %244 = arith.maximumf %242, %243 : vector<32x1xf32>
    %cst_92 = arith.constant 9.99999974E-6 : f32
    %245 = vector.broadcast %cst_92 : f32 to vector<32x1xf32>
    %246 = arith.addf %244, %245 : vector<32x1xf32>
    %247 = math.rsqrt %246 : vector<32x1xf32>
    %248 = vector.broadcast %235 : vector<32x1xf32> to vector<32x256xf32>
    %249 = arith.subf %231, %248 : vector<32x256xf32>
    %250 = arith.mulf %247, %205 : vector<32x1xf32>
    %251 = vector.broadcast %250 : vector<32x1xf32> to vector<32x256xf32>
    %252 = arith.mulf %249, %251 : vector<32x256xf32>
    %253 = vector.broadcast %206 : vector<32x1xf32> to vector<32x256xf32>
    %254 = arith.addf %252, %253 : vector<32x256xf32>
    %255 = tpu.concatenate %230, %254 in 1 : vector<32x256xf32>, vector<32x256xf32> -> vector<32x512xf32>
    %256 = vector.extract_strided_slice %255 {offsets = [0, 0], sizes = [16, 512], strides = [1, 1]} : vector<32x512xf32> to vector<16x512xf32>
    %cst_93 = arith.constant 0.000000e+00 : f32
    %257 = vector.broadcast %cst_93 : f32 to vector<16x512xf32>
    %258 = arith.cmpf ogt, %256, %257 : vector<16x512xf32>
    %cst_94 = arith.constant 0.00999999977 : f32
    %259 = vector.broadcast %cst_94 : f32 to vector<16x512xf32>
    %260 = arith.mulf %259, %256 : vector<16x512xf32>
    %261 = arith.select %258, %256, %260 : vector<16x512xi1>, vector<16x512xf32>
    %262 = vector.extract_strided_slice %255 {offsets = [16, 0], sizes = [16, 512], strides = [1, 1]} : vector<32x512xf32> to vector<16x512xf32>
    %c17_i32_95 = arith.constant 17 : i32
    %263 = tpu.dynamic_rotate %261 by %c17_i32_95 dim 1 : vector<16x512xf32>, i32 -> vector<16x512xf32>
    %264 = arith.mulf %263, %27 : vector<16x512xf32>
    %c0_96 = arith.constant 0 : index
    %c0_97 = arith.constant 0 : index
    %265 = vector.load %arg6[%c0_96, %c0_97] : memref<144x512xf32, #tpu.memory_space<vmem>>, vector<16x512xf32>
    tpu.vector_store %arg6[%c0_96, %c0_97], %264 {strides = array<i32>} : memref<144x512xf32, #tpu.memory_space<vmem>>, vector<16x512xf32>,
    %c16_i32_98 = arith.constant 16 : i32
    %266 = tpu.dynamic_rotate %261 by %c16_i32_98 dim 1 : vector<16x512xf32>, i32 -> vector<16x512xf32>
    %267 = arith.mulf %266, %47 : vector<16x512xf32>
    %c16_99 = arith.constant 16 : index
    %c0_100 = arith.constant 0 : index
    %268 = vector.load %arg6[%c16_99, %c0_100] : memref<144x512xf32, #tpu.memory_space<vmem>>, vector<16x512xf32>
    tpu.vector_store %arg6[%c16_99, %c0_100], %267 {strides = array<i32>} : memref<144x512xf32, #tpu.memory_space<vmem>>, vector<16x512xf32>,
    %c15_i32_101 = arith.constant 15 : i32
    %269 = tpu.dynamic_rotate %261 by %c15_i32_101 dim 1 : vector<16x512xf32>, i32 -> vector<16x512xf32>
    %270 = arith.mulf %269, %67 : vector<16x512xf32>
    %c32_102 = arith.constant 32 : index
    %c0_103 = arith.constant 0 : index
    %271 = vector.load %arg6[%c32_102, %c0_103] : memref<144x512xf32, #tpu.memory_space<vmem>>, vector<16x512xf32>
    tpu.vector_store %arg6[%c32_102, %c0_103], %270 {strides = array<i32>} : memref<144x512xf32, #tpu.memory_space<vmem>>, vector<16x512xf32>,
    %c1_i32_104 = arith.constant 1 : i32
    %272 = tpu.dynamic_rotate %261 by %c1_i32_104 dim 1 : vector<16x512xf32>, i32 -> vector<16x512xf32>
    %273 = arith.mulf %272, %87 : vector<16x512xf32>
    %c48_105 = arith.constant 48 : index
    %c0_106 = arith.constant 0 : index
    %274 = vector.load %arg6[%c48_105, %c0_106] : memref<144x512xf32, #tpu.memory_space<vmem>>, vector<16x512xf32>
    tpu.vector_store %arg6[%c48_105, %c0_106], %273 {strides = array<i32>} : memref<144x512xf32, #tpu.memory_space<vmem>>, vector<16x512xf32>,
    %c64_107 = arith.constant 64 : index
    %c0_108 = arith.constant 0 : index
    %275 = vector.load %arg6[%c64_107, %c0_108] : memref<144x512xf32, #tpu.memory_space<vmem>>, vector<16x512xf32>
    tpu.vector_store %arg6[%c64_107, %c0_108], %261 {strides = array<i32>} : memref<144x512xf32, #tpu.memory_space<vmem>>, vector<16x512xf32>,
    %c511_i32_109 = arith.constant 511 : i32
    %276 = tpu.dynamic_rotate %261 by %c511_i32_109 dim 1 : vector<16x512xf32>, i32 -> vector<16x512xf32>
    %277 = arith.mulf %276, %107 : vector<16x512xf32>
    %c80 = arith.constant 80 : index
    %c0_110 = arith.constant 0 : index
    %278 = vector.load %arg6[%c80, %c0_110] : memref<144x512xf32, #tpu.memory_space<vmem>>, vector<16x512xf32>
    tpu.vector_store %arg6[%c80, %c0_110], %277 {strides = array<i32>} : memref<144x512xf32, #tpu.memory_space<vmem>>, vector<16x512xf32>,
    %c497_i32_111 = arith.constant 497 : i32
    %279 = tpu.dynamic_rotate %261 by %c497_i32_111 dim 1 : vector<16x512xf32>, i32 -> vector<16x512xf32>
    %280 = arith.mulf %279, %127 : vector<16x512xf32>
    %c96 = arith.constant 96 : index
    %c0_112 = arith.constant 0 : index
    %281 = vector.load %arg6[%c96, %c0_112] : memref<144x512xf32, #tpu.memory_space<vmem>>, vector<16x512xf32>
    tpu.vector_store %arg6[%c96, %c0_112], %280 {strides = array<i32>} : memref<144x512xf32, #tpu.memory_space<vmem>>, vector<16x512xf32>,
    %c496_i32_113 = arith.constant 496 : i32
    %282 = tpu.dynamic_rotate %261 by %c496_i32_113 dim 1 : vector<16x512xf32>, i32 -> vector<16x512xf32>
    %283 = arith.mulf %282, %147 : vector<16x512xf32>
    %c112 = arith.constant 112 : index
    %c0_114 = arith.constant 0 : index
    %284 = vector.load %arg6[%c112, %c0_114] : memref<144x512xf32, #tpu.memory_space<vmem>>, vector<16x512xf32>
    tpu.vector_store %arg6[%c112, %c0_114], %283 {strides = array<i32>} : memref<144x512xf32, #tpu.memory_space<vmem>>, vector<16x512xf32>,
    %c495_i32_115 = arith.constant 495 : i32
    %285 = tpu.dynamic_rotate %261 by %c495_i32_115 dim 1 : vector<16x512xf32>, i32 -> vector<16x512xf32>
    %286 = arith.mulf %285, %167 : vector<16x512xf32>
    %c128 = arith.constant 128 : index
    %c0_116 = arith.constant 0 : index
    %287 = vector.load %arg6[%c128, %c0_116] : memref<144x512xf32, #tpu.memory_space<vmem>>, vector<16x512xf32>
    tpu.vector_store %arg6[%c128, %c0_116], %286 {strides = array<i32>} : memref<144x512xf32, #tpu.memory_space<vmem>>, vector<16x512xf32>,
    %c0_117 = arith.constant 0 : index
    %c0_118 = arith.constant 0 : index
    %288 = vector.load %arg6[%c0_117, %c0_118] : memref<144x512xf32, #tpu.memory_space<vmem>>, vector<144x512xf32>
    %289 = arith.truncf %288 : vector<144x512xf32> to vector<144x512xbf16>
    %c0_119 = arith.constant 0 : index
    %c0_120 = arith.constant 0 : index
    %290 = vector.load %arg3[%c0_119, %c0_120] : memref<16x144xbf16, #tpu.memory_space<vmem>>, vector<16x144xbf16>
    %cst_121 = arith.constant dense<0.000000e+00> : vector<16x512xf32>
    %291 = tpu.matmul %290, %289, %cst_121 {dimension_numbers = #tpu.dot_dimension_numbers<[1], [0], [0], [1], [0, 0, 1, 1], [], []>} : vector<16x144xbf16>, vector<144x512xbf16>, vector<16x512xf32> -> vector<16x512xf32>
    %c0_122 = arith.constant 0 : index
    %c2 = arith.constant 2 : index
    %292 = vector.load %arg4[%c0_122, %c2] : memref<32x4xf32, #tpu.memory_space<vmem>>, vector<16x1xf32>
    %c0_123 = arith.constant 0 : index
    %c3 = arith.constant 3 : index
    %293 = vector.load %arg4[%c0_123, %c3] : memref<32x4xf32, #tpu.memory_space<vmem>>, vector<16x1xf32>
    %294 = vector.extract_strided_slice %291 {offsets = [0, 0], sizes = [16, 256], strides = [1, 1]} : vector<16x512xf32> to vector<16x256xf32>
    %cst_124 = arith.constant dense<0.000000e+00> : vector<16xf32>
    %295 = vector.multi_reduction <add>, %294, %cst_124 [1] : vector<16x256xf32> to vector<16xf32>
    %296 = vector.shape_cast %295 : vector<16xf32> to vector<16x1xf32>
    %cst_125 = arith.constant 2.560000e+02 : f32
    %297 = vector.broadcast %cst_125 : f32 to vector<16x1xf32>
    %298 = arith.divf %296, %297 : vector<16x1xf32>
    %299 = arith.mulf %294, %294 : vector<16x256xf32>
    %cst_126 = arith.constant dense<0.000000e+00> : vector<16xf32>
    %300 = vector.multi_reduction <add>, %299, %cst_126 [1] : vector<16x256xf32> to vector<16xf32>
    %301 = vector.shape_cast %300 : vector<16xf32> to vector<16x1xf32>
    %cst_127 = arith.constant 2.560000e+02 : f32
    %302 = vector.broadcast %cst_127 : f32 to vector<16x1xf32>
    %303 = arith.divf %301, %302 : vector<16x1xf32>
    %304 = arith.mulf %298, %298 : vector<16x1xf32>
    %305 = arith.subf %303, %304 : vector<16x1xf32>
    %cst_128 = arith.constant 0.000000e+00 : f32
    %306 = vector.broadcast %cst_128 : f32 to vector<16x1xf32>
    %307 = arith.maximumf %305, %306 : vector<16x1xf32>
    %cst_129 = arith.constant 9.99999974E-6 : f32
    %308 = vector.broadcast %cst_129 : f32 to vector<16x1xf32>
    %309 = arith.addf %307, %308 : vector<16x1xf32>
    %310 = math.rsqrt %309 : vector<16x1xf32>
    %311 = vector.broadcast %298 : vector<16x1xf32> to vector<16x256xf32>
    %312 = arith.subf %294, %311 : vector<16x256xf32>
    %313 = arith.mulf %310, %292 : vector<16x1xf32>
    %314 = vector.broadcast %313 : vector<16x1xf32> to vector<16x256xf32>
    %315 = arith.mulf %312, %314 : vector<16x256xf32>
    %316 = vector.broadcast %293 : vector<16x1xf32> to vector<16x256xf32>
    %317 = arith.addf %315, %316 : vector<16x256xf32>
    %318 = vector.extract_strided_slice %291 {offsets = [0, 256], sizes = [16, 256], strides = [1, 1]} : vector<16x512xf32> to vector<16x256xf32>
    %cst_130 = arith.constant dense<0.000000e+00> : vector<16xf32>
    %319 = vector.multi_reduction <add>, %318, %cst_130 [1] : vector<16x256xf32> to vector<16xf32>
    %320 = vector.shape_cast %319 : vector<16xf32> to vector<16x1xf32>
    %cst_131 = arith.constant 2.560000e+02 : f32
    %321 = vector.broadcast %cst_131 : f32 to vector<16x1xf32>
    %322 = arith.divf %320, %321 : vector<16x1xf32>
    %323 = arith.mulf %318, %318 : vector<16x256xf32>
    %cst_132 = arith.constant dense<0.000000e+00> : vector<16xf32>
    %324 = vector.multi_reduction <add>, %323, %cst_132 [1] : vector<16x256xf32> to vector<16xf32>
    %325 = vector.shape_cast %324 : vector<16xf32> to vector<16x1xf32>
    %cst_133 = arith.constant 2.560000e+02 : f32
    %326 = vector.broadcast %cst_133 : f32 to vector<16x1xf32>
    %327 = arith.divf %325, %326 : vector<16x1xf32>
    %328 = arith.mulf %322, %322 : vector<16x1xf32>
    %329 = arith.subf %327, %328 : vector<16x1xf32>
    %cst_134 = arith.constant 0.000000e+00 : f32
    %330 = vector.broadcast %cst_134 : f32 to vector<16x1xf32>
    %331 = arith.maximumf %329, %330 : vector<16x1xf32>
    %cst_135 = arith.constant 9.99999974E-6 : f32
    %332 = vector.broadcast %cst_135 : f32 to vector<16x1xf32>
    %333 = arith.addf %331, %332 : vector<16x1xf32>
    %334 = math.rsqrt %333 : vector<16x1xf32>
    %335 = vector.broadcast %322 : vector<16x1xf32> to vector<16x256xf32>
    %336 = arith.subf %318, %335 : vector<16x256xf32>
    %337 = arith.mulf %334, %292 : vector<16x1xf32>
    %338 = vector.broadcast %337 : vector<16x1xf32> to vector<16x256xf32>
    %339 = arith.mulf %336, %338 : vector<16x256xf32>
    %340 = vector.broadcast %293 : vector<16x1xf32> to vector<16x256xf32>
    %341 = arith.addf %339, %340 : vector<16x256xf32>
    %342 = tpu.concatenate %317, %341 in 1 : vector<16x256xf32>, vector<16x256xf32> -> vector<16x512xf32>
    %343 = arith.addf %342, %262 : vector<16x512xf32>
    %cst_136 = arith.constant 0.000000e+00 : f32
    %344 = vector.broadcast %cst_136 : f32 to vector<16x512xf32>
    %345 = arith.cmpf ogt, %343, %344 : vector<16x512xf32>
    %cst_137 = arith.constant 0.00999999977 : f32
    %346 = vector.broadcast %cst_137 : f32 to vector<16x512xf32>
    %347 = arith.mulf %346, %343 : vector<16x512xf32>
    %348 = arith.select %345, %343, %347 : vector<16x512xi1>, vector<16x512xf32>
    %c0_138 = arith.constant 0 : index
    %c0_139 = arith.constant 0 : index
    %349 = vector.load %arg5[%c0_138, %c0_139] : memref<16x512xf32, #tpu.memory_space<vmem>>, vector<16x512xf32>
    tpu.vector_store %arg5[%c0_138, %c0_139], %348 {strides = array<i32>} : memref<16x512xf32, #tpu.memory_space<vmem>>, vector<16x512xf32>,
    return
  }
  func.func @transform_0(%arg0: i32) -> (i32, i32) {
    %c0_i32 = arith.constant 0 : i32
    %c0_i32_0 = arith.constant 0 : i32
    return %c0_i32, %arg0 : i32, i32
  }
  func.func @transform_1(%arg0: i32) -> (i32, i32) {
    %c0_i32 = arith.constant 0 : i32
    %c0_i32_0 = arith.constant 0 : i32
    %c0_i32_1 = arith.constant 0 : i32
    return %c0_i32, %c0_i32_0 : i32, i32
  }
  func.func @transform_2(%arg0: i32) -> (i32, i32) {
    %c0_i32 = arith.constant 0 : i32
    %c0_i32_0 = arith.constant 0 : i32
    %c0_i32_1 = arith.constant 0 : i32
    return %c0_i32, %c0_i32_0 : i32, i32
  }
  func.func @transform_3(%arg0: i32) -> (i32, i32) {
    %c0_i32 = arith.constant 0 : i32
    %c0_i32_0 = arith.constant 0 : i32
    %c0_i32_1 = arith.constant 0 : i32
    return %c0_i32, %c0_i32_0 : i32, i32
  }
  func.func @transform_4(%arg0: i32) -> (i32, i32) {
    %c0_i32 = arith.constant 0 : i32
    %c0_i32_0 = arith.constant 0 : i32
    return %c0_i32, %arg0 : i32, i32
  }
}

</mosaic_0001>

<llo_original>
// kernel: tpu_custom_call.1
$region0: #{tpu_custom_call.1}
  #allocation0 [shape = 'u32[]', space=smem, size = 0x4, offset = 0x4, fixed_abs, tag = 'smem constant byte address 0x4 - core index']
  #allocation1 [shape = 'u32[144,128]{1,0:T(1,128)}', space=vmem, size = 0x12000, scoped, tag = 'internal scratch']
  #allocation2 [shape = 'f32[144,512]{1,0:T(8,128)}', space=vmem, size = 0x48000, scoped, tag = 'scratch operand']
  %s0 = inlined_call_operand.vmem [shape: f32[8,512], index: 0, kind: input, shape index: {}]
  %s1 = inlined_call_operand.hbm [shape: bf16[32,72], index: 1, kind: input, shape index: {}]
  %s2 = inlined_call_operand.hbm [shape: bf16[16,144], index: 2, kind: input, shape index: {}]
  %s3 = inlined_call_operand.vmem [shape: f32[32,4], index: 3, kind: input, shape index: {}]
  %s4 = inlined_call_operand.hbm [shape: f32[16,512], index: 4, kind: output, shape index: {}]
  %s5 = sld [smem:[#allocation0]]
  $region34: #{tpu_custom_call.1} parent=0
    _
  %s7 = ssub.s32 1, %s5
  %s8 = scalar_select 0, %s7, %s5
  $region1: #{tpu_custom_call.1} parent=0
    #allocation3 [shape = 'u8[8192]{0}', space=vmem, size = 0x2000, scoped, tag = 'input window, operand 1, single buffered']
    #allocation4 [shape = 's32[1]{0}', space=sflag, size = 0x4, scoped, tag = 'scoped memory for tpu_custom_call.1']
    #allocation5 [shape = 's32[1]{0}', space=sflag, size = 0x4, scoped, tag = 'scoped memory for tpu_custom_call.1']
    #allocation6 [shape = 'u8[8192]{0}', space=vmem, size = 0x2000, scoped, tag = 'input window, operand 2, single buffered']
    #allocation7 [shape = 's32[1]{0}', space=sflag, size = 0x4, scoped, tag = 'scoped memory for tpu_custom_call.1']
    #allocation8 [shape = 'u8[32768]{0}', space=vmem, size = 0x8000, scoped, tag = 'output window, operand 0, single buffered']
    %9 = vsyncpa [#allocation4], 0
    %10 = vsyncpa [#allocation7], 0
    %11 = vsyncpa [#allocation5], 0
    // Predicated region
    $region2: #{tpu_custom_call.1} parent=1 // pred_check
      _
    $region3: #{tpu_custom_call.1} parent=1 // pred_check_branch
      %13 = sbr.rel (0) target = $region5
    $region4: #{tpu_custom_call.1} parent=1 // pred_region
      _
    $region5: #{tpu_custom_call.1} parent=1 // pred_fallthru
      _
    // Predicated region
    $region6: #{tpu_custom_call.1} parent=1 // pred_check
      _
    $region7: #{tpu_custom_call.1} parent=1 // pred_check_branch
      %15 = sbr.rel (0) target = $region9
    $region8: #{tpu_custom_call.1} parent=1 // pred_region
      %s17 = ssub.s32 256, 256
      %18 = vsyncadd [#allocation4], %s17
      %s19 = sshll.u32 [#allocation3], 4
      %s20 = int_to_ptr.vmem [resolvable:$true] %s19
      %25 = dma.hbm_to_vmem [thread:$0]  %s1, 256, %s20, [#allocation4], 64, 64, 4
    $region9: #{tpu_custom_call.1} parent=1 // pred_fallthru
      _
    // Predicated region
    $region10: #{tpu_custom_call.1} parent=1 // pred_check
      _
    $region11: #{tpu_custom_call.1} parent=1 // pred_check_branch
      %27 = sbr.rel (0) target = $region13
    $region12: #{tpu_custom_call.1} parent=1 // pred_region
      %s29 = ssub.s32 256, 256
      %30 = vsyncadd [#allocation7], %s29
      %s31 = sshll.u32 [#allocation6], 4
      %s32 = int_to_ptr.vmem [resolvable:$true] %s31
      %37 = dma.hbm_to_vmem [thread:$0]  %s2, 256, %s32, [#allocation7], 128, 128, 8
    $region13: #{tpu_custom_call.1} parent=1 // pred_fallthru
      _
    // Predicated region
    $region14: #{tpu_custom_call.1} parent=1 // pred_check
      _
    $region15: #{tpu_custom_call.1} parent=1 // pred_check_branch
      %39 = sbr.rel (0) target = $region17
    $region16: #{tpu_custom_call.1} parent=1 // pred_region
      _
    $region17: #{tpu_custom_call.1} parent=1 // pred_fallthru
      _
    // Predicated region
    $region18: #{tpu_custom_call.1} parent=1 // pred_check
      _
    $region19: #{tpu_custom_call.1} parent=1 // pred_check_branch
      %41 = sbr.rel (0) target = $region21
    $region20: #{tpu_custom_call.1} parent=1 // pred_region
      %42 = dma.done [#allocation4], 256
    $region21: #{tpu_custom_call.1} parent=1 // pred_fallthru
      _
    // Predicated region
    $region22: #{tpu_custom_call.1} parent=1 // pred_check
      _
    $region23: #{tpu_custom_call.1} parent=1 // pred_check_branch
      %44 = sbr.rel (0) target = $region25
    $region24: #{tpu_custom_call.1} parent=1 // pred_region
      %45 = dma.done [#allocation7], 256
    $region25: #{tpu_custom_call.1} parent=1 // pred_fallthru
      _
    %v47 = vld [vmem:[%s0] sm:$0xff]
    %v48 = vld [vmem:[%s0 + $0x8] sm:$0xff]
    %v49 = vld [vmem:[%s0 + $0x10] sm:$0xff]
    %v50 = vld [vmem:[%s0 + $0x18] sm:$0xff]
    %v51 = vlaneseq
    %v52 = vand.u32 %v51, 127
    %v53 = vadd.s32 %v52, 128
    %v54 = vadd.s32 %v52, 256
    %v55 = vadd.s32 %v52, 384
    %v56 = vand.u32 %v52, 255
    %v57 = vand.u32 %v53, 255
    %v58 = vand.u32 %v54, 255
    %v59 = vand.u32 %v55, 255
    %v60 = vshra.s32 %v56, 4
    %v61 = vshra.s32 %v57, 4
    %v62 = vshra.s32 %v58, 4
    %v63 = vshra.s32 %v59, 4
    %v64 = vand.u32 %v56, 15
    %v65 = vand.u32 %v57, 15
    %v66 = vand.u32 %v58, 15
    %v67 = vand.u32 %v59, 15
    %v68 = vadd.s32 %v60, 4294967295
    %v69 = vadd.s32 %v61, 4294967295
    %v70 = vadd.s32 %v62, 4294967295
    %v71 = vadd.s32 %v63, 4294967295
    %v72 = vadd.s32 %v64, 4294967295
    %v73 = vadd.s32 %v65, 4294967295
    %v74 = vadd.s32 %v66, 4294967295
    %v75 = vadd.s32 %v67, 4294967295
    %vm76 = vcmp.ge.s32.totalorder %v68, 0
    %vm77 = vcmp.ge.s32.totalorder %v69, 0
    %vm78 = vcmp.ge.s32.totalorder %v70, 0
    %vm79 = vcmp.ge.s32.totalorder %v71, 0
    %vm80 = vcmp.lt.s32.totalorder %v68, 16
    %vm81 = vcmp.lt.s32.totalorder %v69, 16
    %vm82 = vcmp.lt.s32.totalorder %v70, 16
    %vm83 = vcmp.lt.s32.totalorder %v71, 16
    %vm84 = vmand %vm76, %vm80
    %vm85 = vmand %vm77, %vm81
    %vm86 = vmand %vm78, %vm82
    %vm87 = vmand %vm79, %vm83
    %vm88 = vcmp.ge.s32.totalorder %v72, 0
    %vm89 = vcmp.ge.s32.totalorder %v73, 0
    %vm90 = vcmp.ge.s32.totalorder %v74, 0
    %vm91 = vcmp.ge.s32.totalorder %v75, 0
    %vm92 = vmand %vm84, %vm88
    %vm93 = vmand %vm85, %vm89
    %vm94 = vmand %vm86, %vm90
    %vm95 = vmand %vm87, %vm91
    %vm96 = vcmp.lt.s32.totalorder %v72, 16
    %vm97 = vcmp.lt.s32.totalorder %v73, 16
    %vm98 = vcmp.lt.s32.totalorder %v74, 16
    %vm99 = vcmp.lt.s32.totalorder %v75, 16
    %vm100 = vmand %vm92, %vm96
    %vm101 = vmand %vm93, %vm97
    %vm102 = vmand %vm94, %vm98
    %vm103 = vmand %vm95, %vm99
    %v104 = vsel %vm100, 1.0, 0.0
    %v105 = vsel %vm101, 1.0, 0.0
    %v106 = vsel %vm102, 1.0, 0.0
    %v107 = vsel %vm103, 1.0, 0.0
    %vm108 = vcmp.ge.s32.totalorder %v64, 0
    %vm109 = vcmp.ge.s32.totalorder %v65, 0
    %vm110 = vcmp.ge.s32.totalorder %v66, 0
    %vm111 = vcmp.ge.s32.totalorder %v67, 0
    %vm112 = vmand %vm84, %vm108
    %vm113 = vmand %vm85, %vm109
    %vm114 = vmand %vm86, %vm110
    %vm115 = vmand %vm87, %vm111
    %vm116 = vcmp.lt.s32.totalorder %v64, 16
    %vm117 = vcmp.lt.s32.totalorder %v65, 16
    %vm118 = vcmp.lt.s32.totalorder %v66, 16
    %vm119 = vcmp.lt.s32.totalorder %v67, 16
    %vm120 = vmand %vm112, %vm116
    %vm121 = vmand %vm113, %vm117
    %vm122 = vmand %vm114, %vm118
    %vm123 = vmand %vm115, %vm119
    %v124 = vsel %vm120, 1.0, 0.0
    %v125 = vsel %vm121, 1.0, 0.0
    %v126 = vsel %vm122, 1.0, 0.0
    %v127 = vsel %vm123, 1.0, 0.0
    %v128 = vadd.s32 %v64, 1
    %v129 = vadd.s32 %v65, 1
    %v130 = vadd.s32 %v66, 1
    %v131 = vadd.s32 %v67, 1
    %vm132 = vcmp.ge.s32.totalorder %v128, 0
    %vm133 = vcmp.ge.s32.totalorder %v129, 0
    %vm134 = vcmp.ge.s32.totalorder %v130, 0
    %vm135 = vcmp.ge.s32.totalorder %v131, 0
    %vm136 = vmand %vm84, %vm132
    %vm137 = vmand %vm85, %vm133
    %vm138 = vmand %vm86, %vm134
    %vm139 = vmand %vm87, %vm135
    %vm140 = vcmp.lt.s32.totalorder %v128, 16
    %vm141 = vcmp.lt.s32.totalorder %v129, 16
    %vm142 = vcmp.lt.s32.totalorder %v130, 16
    %vm143 = vcmp.lt.s32.totalorder %v131, 16
    %vm144 = vmand %vm136, %vm140
    %vm145 = vmand %vm137, %vm141
    %vm146 = vmand %vm138, %vm142
    %vm147 = vmand %vm139, %vm143
    %v148 = vsel %vm144, 1.0, 0.0
    %v149 = vsel %vm145, 1.0, 0.0
    %v150 = vsel %vm146, 1.0, 0.0
    %v151 = vsel %vm147, 1.0, 0.0
    %vm152 = vcmp.ge.s32.totalorder %v60, 0
    %vm153 = vcmp.ge.s32.totalorder %v61, 0
    %vm154 = vcmp.ge.s32.totalorder %v62, 0
    %vm155 = vcmp.ge.s32.totalorder %v63, 0
    %vm156 = vcmp.lt.s32.totalorder %v60, 16
    %vm157 = vcmp.lt.s32.totalorder %v61, 16
    %vm158 = vcmp.lt.s32.totalorder %v62, 16
    %vm159 = vcmp.lt.s32.totalorder %v63, 16
    %vm160 = vmand %vm152, %vm156
    %vm161 = vmand %vm153, %vm157
    %vm162 = vmand %vm154, %vm158
    %vm163 = vmand %vm155, %vm159
    %vm164 = vmand %vm160, %vm88
    %vm165 = vmand %vm161, %vm89
    %vm166 = vmand %vm162, %vm90
    %vm167 = vmand %vm163, %vm91
    %vm168 = vmand %vm164, %vm96
    %vm169 = vmand %vm165, %vm97
    %vm170 = vmand %vm166, %vm98
    %vm171 = vmand %vm167, %vm99
    %v172 = vsel %vm168, 1.0, 0.0
    %v173 = vsel %vm169, 1.0, 0.0
    %v174 = vsel %vm170, 1.0, 0.0
    %v175 = vsel %vm171, 1.0, 0.0
    %vm176 = vmand %vm160, %vm132
    %vm177 = vmand %vm161, %vm133
    %vm178 = vmand %vm162, %vm134
    %vm179 = vmand %vm163, %vm135
    %vm180 = vmand %vm176, %vm140
    %vm181 = vmand %vm177, %vm141
    %vm182 = vmand %vm178, %vm142
    %vm183 = vmand %vm179, %vm143
    %v184 = vsel %vm180, 1.0, 0.0
    %v185 = vsel %vm181, 1.0, 0.0
    %v186 = vsel %vm182, 1.0, 0.0
    %v187 = vsel %vm183, 1.0, 0.0
    %v188 = vadd.s32 %v60, 1
    %v189 = vadd.s32 %v61, 1
    %v190 = vadd.s32 %v62, 1
    %v191 = vadd.s32 %v63, 1
    %vm192 = vcmp.ge.s32.totalorder %v188, 0
    %vm193 = vcmp.ge.s32.totalorder %v189, 0
    %vm194 = vcmp.ge.s32.totalorder %v190, 0
    %vm195 = vcmp.ge.s32.totalorder %v191, 0
    %vm196 = vcmp.lt.s32.totalorder %v188, 16
    %vm197 = vcmp.lt.s32.totalorder %v189, 16
    %vm198 = vcmp.lt.s32.totalorder %v190, 16
    %vm199 = vcmp.lt.s32.totalorder %v191, 16
    %vm200 = vmand %vm192, %vm196
    %vm201 = vmand %vm193, %vm197
    %vm202 = vmand %vm194, %vm198
    %vm203 = vmand %vm195, %vm199
    %vm204 = vmand %vm200, %vm88
    %vm205 = vmand %vm201, %vm89
    %vm206 = vmand %vm202, %vm90
    %vm207 = vmand %vm203, %vm91
    %vm208 = vmand %vm204, %vm96
    %vm209 = vmand %vm205, %vm97
    %vm210 = vmand %vm206, %vm98
    %vm211 = vmand %vm207, %vm99
    %v212 = vsel %vm208, 1.0, 0.0
    %v213 = vsel %vm209, 1.0, 0.0
    %v214 = vsel %vm210, 1.0, 0.0
    %v215 = vsel %vm211, 1.0, 0.0
    %vm216 = vmand %vm200, %vm108
    %vm217 = vmand %vm201, %vm109
    %vm218 = vmand %vm202, %vm110
    %vm219 = vmand %vm203, %vm111
    %vm220 = vmand %vm216, %vm116
    %vm221 = vmand %vm217, %vm117
    %vm222 = vmand %vm218, %vm118
    %vm223 = vmand %vm219, %vm119
    %v224 = vsel %vm220, 1.0, 0.0
    %v225 = vsel %vm221, 1.0, 0.0
    %v226 = vsel %vm222, 1.0, 0.0
    %v227 = vsel %vm223, 1.0, 0.0
    %vm228 = vmand %vm200, %vm132
    %vm229 = vmand %vm201, %vm133
    %vm230 = vmand %vm202, %vm134
    %vm231 = vmand %vm203, %vm135
    %vm232 = vmand %vm228, %vm140
    %vm233 = vmand %vm229, %vm141
    %vm234 = vmand %vm230, %vm142
    %vm235 = vmand %vm231, %vm143
    %v236 = vsel %vm232, 1.0, 0.0
    %v237 = vsel %vm233, 1.0, 0.0
    %v238 = vsel %vm234, 1.0, 0.0
    %v239 = vsel %vm235, 1.0, 0.0
    %240 = vrot.lane.b32.xlu0 %v47, 17
    %v241 = vpop.permute.xlu0 %240
    %242 = vrot.lane.b32.xlu0 %v48, 17
    %v243 = vpop.permute.xlu0 %242
    %244 = vrot.lane.b32.xlu0 %v49, 17
    %v245 = vpop.permute.xlu0 %244
    %246 = vrot.lane.b32.xlu0 %v50, 17
    %v247 = vpop.permute.xlu0 %246
    %vm248 = vcmp.lt.s32.totalorder %v52, 17
    %v249 = vsel %vm248, %v245, %v247
    %v250 = vsel %vm248, %v243, %v245
    %v251 = vsel %vm248, %v241, %v243
    %v252 = vsel %vm248, %v247, %v241
    %v253 = vmul.f32 %v252, %v104
    %v254 = vmul.f32 %v251, %v105
    %v255 = vmul.f32 %v250, %v106
    %v256 = vmul.f32 %v249, %v107
    %257 = vst [vmem:[#allocation2] sm:$0xff] %v253
    %258 = vst [vmem:[#allocation2 + $0x8] sm:$0xff] %v254
    %259 = vst [vmem:[#allocation2 + $0x10] sm:$0xff] %v255
    %260 = vst [vmem:[#allocation2 + $0x18] sm:$0xff] %v256
    %261 = vrot.lane.b32.xlu0 %v47, 16
    %v262 = vpop.permute.xlu0 %261
    %263 = vrot.lane.b32.xlu0 %v48, 16
    %v264 = vpop.permute.xlu0 %263
    %265 = vrot.lane.b32.xlu0 %v49, 16
    %v266 = vpop.permute.xlu0 %265
    %267 = vrot.lane.b32.xlu0 %v50, 16
    %v268 = vpop.permute.xlu0 %267
    %vm269 = vcmp.lt.s32.totalorder %v52, 16
    %v270 = vsel %vm269, %v266, %v268
    %v271 = vsel %vm269, %v264, %v266
    %v272 = vsel %vm269, %v262, %v264
    %v273 = vsel %vm269, %v268, %v262
    %v274 = vmul.f32 %v273, %v124
    %v275 = vmul.f32 %v272, %v125
    %v276 = vmul.f32 %v271, %v126
    %v277 = vmul.f32 %v270, %v127
    %278 = vst [vmem:[#allocation2 + $0x20] sm:$0xff] %v274
    %279 = vst [vmem:[#allocation2 + $0x28] sm:$0xff] %v275
    %280 = vst [vmem:[#allocation2 + $0x30] sm:$0xff] %v276
    %281 = vst [vmem:[#allocation2 + $0x38] sm:$0xff] %v277
    %282 = vrot.lane.b32.xlu0 %v47, 15
    %v283 = vpop.permute.xlu0 %282
    %284 = vrot.lane.b32.xlu0 %v48, 15
    %v285 = vpop.permute.xlu0 %284
    %286 = vrot.lane.b32.xlu0 %v49, 15
    %v287 = vpop.permute.xlu0 %286
    %288 = vrot.lane.b32.xlu0 %v50, 15
    %v289 = vpop.permute.xlu0 %288
    %vm290 = vcmp.lt.s32.totalorder %v52, 15
    %v291 = vsel %vm290, %v287, %v289
    %v292 = vsel %vm290, %v285, %v287
    %v293 = vsel %vm290, %v283, %v285
    %v294 = vsel %vm290, %v289, %v283
    %v295 = vmul.f32 %v294, %v148
    %v296 = vmul.f32 %v293, %v149
    %v297 = vmul.f32 %v292, %v150
    %v298 = vmul.f32 %v291, %v151
    %299 = vst [vmem:[#allocation2 + $0x40] sm:$0xff] %v295
    %300 = vst [vmem:[#allocation2 + $0x48] sm:$0xff] %v296
    %301 = vst [vmem:[#allocation2 + $0x50] sm:$0xff] %v297
    %302 = vst [vmem:[#allocation2 + $0x58] sm:$0xff] %v298
    %303 = vrot.lane.b32.xlu0 %v47, 1
    %v304 = vpop.permute.xlu0 %303
    %305 = vrot.lane.b32.xlu0 %v48, 1
    %v306 = vpop.permute.xlu0 %305
    %307 = vrot.lane.b32.xlu0 %v49, 1
    %v308 = vpop.permute.xlu0 %307
    %309 = vrot.lane.b32.xlu0 %v50, 1
    %v310 = vpop.permute.xlu0 %309
    %vm311 = vcmp.lt.s32.totalorder %v52, 1
    %v312 = vsel %vm311, %v308, %v310
    %v313 = vsel %vm311, %v306, %v308
    %v314 = vsel %vm311, %v304, %v306
    %v315 = vsel %vm311, %v310, %v304
    %v316 = vmul.f32 %v315, %v172
    %v317 = vmul.f32 %v314, %v173
    %v318 = vmul.f32 %v313, %v174
    %v319 = vmul.f32 %v312, %v175
    %320 = vst [vmem:[#allocation2 + $0x60] sm:$0xff] %v316
    %321 = vst [vmem:[#allocation2 + $0x68] sm:$0xff] %v317
    %322 = vst [vmem:[#allocation2 + $0x70] sm:$0xff] %v318
    %323 = vst [vmem:[#allocation2 + $0x78] sm:$0xff] %v319
    %324 = vst [vmem:[#allocation2 + $0x80] sm:$0xff] %v47
    %325 = vst [vmem:[#allocation2 + $0x88] sm:$0xff] %v48
    %326 = vst [vmem:[#allocation2 + $0x90] sm:$0xff] %v49
    %327 = vst [vmem:[#allocation2 + $0x98] sm:$0xff] %v50
    %328 = vrot.lane.b32.xlu0 %v47, 127
    %v329 = vpop.permute.xlu0 %328
    %330 = vrot.lane.b32.xlu0 %v48, 127
    %v331 = vpop.permute.xlu0 %330
    %332 = vrot.lane.b32.xlu0 %v49, 127
    %v333 = vpop.permute.xlu0 %332
    %334 = vrot.lane.b32.xlu0 %v50, 127
    %v335 = vpop.permute.xlu0 %334
    %vm336 = vcmp.lt.s32.totalorder %v52, 127
    %v337 = vsel %vm336, %v333, %v335
    %v338 = vsel %vm336, %v331, %v333
    %v339 = vsel %vm336, %v329, %v331
    %v340 = vsel %vm336, %v335, %v329
    %v341 = vmul.f32 %v339, %v184
    %v342 = vmul.f32 %v338, %v185
    %v343 = vmul.f32 %v337, %v186
    %v344 = vmul.f32 %v340, %v187
    %345 = vst [vmem:[#allocation2 + $0xa0] sm:$0xff] %v341
    %346 = vst [vmem:[#allocation2 + $0xa8] sm:$0xff] %v342
    %347 = vst [vmem:[#allocation2 + $0xb0] sm:$0xff] %v343
    %348 = vst [vmem:[#allocation2 + $0xb8] sm:$0xff] %v344
    %349 = vrot.lane.b32.xlu0 %v47, 113
    %v350 = vpop.permute.xlu0 %349
    %351 = vrot.lane.b32.xlu0 %v48, 113
    %v352 = vpop.permute.xlu0 %351
    %353 = vrot.lane.b32.xlu0 %v49, 113
    %v354 = vpop.permute.xlu0 %353
    %355 = vrot.lane.b32.xlu0 %v50, 113
    %v356 = vpop.permute.xlu0 %355
    %vm357 = vcmp.lt.s32.totalorder %v52, 113
    %v358 = vsel %vm357, %v354, %v356
    %v359 = vsel %vm357, %v352, %v354
    %v360 = vsel %vm357, %v350, %v352
    %v361 = vsel %vm357, %v356, %v350
    %v362 = vmul.f32 %v360, %v212
    %v363 = vmul.f32 %v359, %v213
    %v364 = vmul.f32 %v358, %v214
    %v365 = vmul.f32 %v361, %v215
    %366 = vst [vmem:[#allocation2 + $0xc0] sm:$0xff] %v362
    %367 = vst [vmem:[#allocation2 + $0xc8] sm:$0xff] %v363
    %368 = vst [vmem:[#allocation2 + $0xd0] sm:$0xff] %v364
    %369 = vst [vmem:[#allocation2 + $0xd8] sm:$0xff] %v365
    %370 = vrot.lane.b32.xlu0 %v47, 112
    %v371 = vpop.permute.xlu0 %370
    %372 = vrot.lane.b32.xlu0 %v48, 112
    %v373 = vpop.permute.xlu0 %372
    %374 = vrot.lane.b32.xlu0 %v49, 112
    %v375 = vpop.permute.xlu0 %374
    %376 = vrot.lane.b32.xlu0 %v50, 112
    %v377 = vpop.permute.xlu0 %376
    %vm378 = vcmp.lt.s32.totalorder %v52, 112
    %v379 = vsel %vm378, %v375, %v377
    %v380 = vsel %vm378, %v373, %v375
    %v381 = vsel %vm378, %v371, %v373
    %v382 = vsel %vm378, %v377, %v371
    %v383 = vmul.f32 %v381, %v224
    %v384 = vmul.f32 %v380, %v225
    %v385 = vmul.f32 %v379, %v226
    %v386 = vmul.f32 %v382, %v227
    %387 = vst [vmem:[#allocation2 + $0xe0] sm:$0xff] %v383
    %388 = vst [vmem:[#allocation2 + $0xe8] sm:$0xff] %v384
    %389 = vst [vmem:[#allocation2 + $0xf0] sm:$0xff] %v385
    %390 = vst [vmem:[#allocation2 + $0xf8] sm:$0xff] %v386
    %391 = vrot.lane.b32.xlu0 %v47, 111
    %v392 = vpop.permute.xlu0 %391
    %393 = vrot.lane.b32.xlu0 %v48, 111
    %v394 = vpop.permute.xlu0 %393
    %395 = vrot.lane.b32.xlu0 %v49, 111
    %v396 = vpop.permute.xlu0 %395
    %397 = vrot.lane.b32.xlu0 %v50, 111
    %v398 = vpop.permute.xlu0 %397
    %vm399 = vcmp.lt.s32.totalorder %v52, 111
    %v400 = vsel %vm399, %v396, %v398
    %v401 = vsel %vm399, %v394, %v396
    %v402 = vsel %vm399, %v392, %v394
    %v403 = vsel %vm399, %v398, %v392
    %v404 = vmul.f32 %v402, %v236
    %v405 = vmul.f32 %v401, %v237
    %v406 = vmul.f32 %v400, %v238
    %v407 = vmul.f32 %v403, %v239
    %408 = vst [vmem:[#allocation2 + $0x100] sm:$0xff] %v404
    %409 = vst [vmem:[#allocation2 + $0x108] sm:$0xff] %v405
    %410 = vst [vmem:[#allocation2 + $0x110] sm:$0xff] %v406
    %411 = vst [vmem:[#allocation2 + $0x118] sm:$0xff] %v407
    %v412 = vld [vmem:[#allocation2] sm:$0xff]
    %v413 = vld [vmem:[#allocation2 + $0x8] sm:$0xff]
    %v414 = vld [vmem:[#allocation2 + $0x10] sm:$0xff]
    %v415 = vld [vmem:[#allocation2 + $0x18] sm:$0xff]
    %v416 = vld [vmem:[#allocation2 + $0x20] sm:$0xff]
    %v417 = vld [vmem:[#allocation2 + $0x28] sm:$0xff]
    %v418 = vld [vmem:[#allocation2 + $0x30] sm:$0xff]
    %v419 = vld [vmem:[#allocation2 + $0x38] sm:$0xff]
    %v420 = vld [vmem:[#allocation2 + $0x40] sm:$0xff]
    %v421 = vld [vmem:[#allocation2 + $0x48] sm:$0xff]
    %v422 = vld [vmem:[#allocation2 + $0x50] sm:$0xff]
    %v423 = vld [vmem:[#allocation2 + $0x58] sm:$0xff]
    %v424 = vld [vmem:[#allocation2 + $0x60] sm:$0xff]
    %v425 = vld [vmem:[#allocation2 + $0x68] sm:$0xff]
    %v426 = vld [vmem:[#allocation2 + $0x70] sm:$0xff]
    %v427 = vld [vmem:[#allocation2 + $0x78] sm:$0xff]
    %v428 = vld [vmem:[#allocation2 + $0x80] sm:$0xff]
    %v429 = vld [vmem:[#allocation2 + $0x88] sm:$0xff]
    %v430 = vld [vmem:[#allocation2 + $0x90] sm:$0xff]
    %v431 = vld [vmem:[#allocation2 + $0x98] sm:$0xff]
    %v432 = vld [vmem:[#allocation2 + $0xa0] sm:$0xff]
    %v433 = vld [vmem:[#allocation2 + $0xa8] sm:$0xff]
    %v434 = vld [vmem:[#allocation2 + $0xb0] sm:$0xff]
    %v435 = vld [vmem:[#allocation2 + $0xb8] sm:$0xff]
    %v436 = vld [vmem:[#allocation2 + $0xc0] sm:$0xff]
    %v437 = vld [vmem:[#allocation2 + $0xc8] sm:$0xff]
    %v438 = vld [vmem:[#allocation2 + $0xd0] sm:$0xff]
    %v439 = vld [vmem:[#allocation2 + $0xd8] sm:$0xff]
    %v440 = vld [vmem:[#allocation2 + $0xe0] sm:$0xff]
    %v441 = vld [vmem:[#allocation2 + $0xe8] sm:$0xff]
    %v442 = vld [vmem:[#allocation2 + $0xf0] sm:$0xff]
    %v443 = vld [vmem:[#allocation2 + $0xf8] sm:$0xff]
    %v444 = vld [vmem:[#allocation2 + $0x100] sm:$0xff]
    %v445 = vld [vmem:[#allocation2 + $0x108] sm:$0xff]
    %v446 = vld [vmem:[#allocation2 + $0x110] sm:$0xff]
    %v447 = vld [vmem:[#allocation2 + $0x118] sm:$0xff]
    %v448 = vpack.c.bf16 %v416, %v412
    %v449 = vpack.c.bf16 %v417, %v413
    %v450 = vpack.c.bf16 %v418, %v414
    %v451 = vpack.c.bf16 %v419, %v415
    %v452 = vpack.c.bf16 %v424, %v420
    %v453 = vpack.c.bf16 %v425, %v421
    %v454 = vpack.c.bf16 %v426, %v422
    %v455 = vpack.c.bf16 %v427, %v423
    %v456 = vpack.c.bf16 %v432, %v428
    %v457 = vpack.c.bf16 %v433, %v429
    %v458 = vpack.c.bf16 %v434, %v430
    %v459 = vpack.c.bf16 %v435, %v431
    %v460 = vpack.c.bf16 %v440, %v436
    %v461 = vpack.c.bf16 %v441, %v437
    %v462 = vpack.c.bf16 %v442, %v438
    %v463 = vpack.c.bf16 %v443, %v439
    %v464 = vpack.c.bf16 %v444, %v444
    %v465 = vpack.c.bf16 %v445, %v445
    %v466 = vpack.c.bf16 %v446, %v446
    %v467 = vpack.c.bf16 %v447, %v447
    %v468 = vld [vmem:[#allocation3] sm:$0xf]
    %v469 = vld [vmem:[#allocation3 + $0x4] sm:$0xf]
    %v470 = vld [vmem:[#allocation3 + $0x8] sm:$0xf]
    %v471 = vld [vmem:[#allocation3 + $0xc] sm:$0xf]
    %v476 = vunpack.c.l.b16 %v468
    %v477 = vunpack.c.l.b16 %v469
    %v478 = vunpack.c.l.b16 %v470
    %v479 = vunpack.c.l.b16 %v471
    %v480 = vpack.c.b16 %v477, %v476
    %v481 = vpack.c.b16 %v479, %v478
    %vm482 = vcmask 588800
    %v484 = vsel %vm482, %v480, 0
    %v487 = vsel %vm482, %v481, 0
    %vm489 = vcmask 1043456
    %v491 = vsel %vm489, %v464, 0
    %v494 = vsel %vm489, %v465, 0
    %v497 = vsel %vm489, %v466, 0
    %v500 = vsel %vm489, %v467, 0
    %502 = vmatprep.subr.bf16.mxu0 %v449
    %503 = vmatpush1.bf16.msra.mxu0 %v448
    %504 = vmatprep.subr.bf16.mxu0 %v453
    %505 = vmatpush1.bf16.msra.mxu0 %v452
    %506 = vmatprep.subr.bf16.mxu0 %v457
    %507 = vmatpush1.bf16.msra.mxu0 %v456
    %508 = vmatprep.subr.bf16.mxu0 %v461
    %509 = vmatpush1.bf16.msra.mxu0 %v460
    %510 = vmatprep.subr.bf16.mxu0 %v494
    %511 = vmatpush1.bf16.msra.mxu0 %v491
    %512 = vmatprep.subr.bf16.mxu0 0
    %513 = vmatpush1.bf16.msra.mxu0 0
    %514 = vmatprep.subr.bf16.mxu0 0
    %515 = vmatpush1.bf16.msra.mxu0 0
    %516 = vmatprep.subr.bf16.mxu0 0
    %517 = vmatpush1.bf16.msra.mxu0 0
    %518 = vmatprep.subr.bf16.mxu0 0
    %519 = vmatpush1.bf16.msra.mxu0 0
    %520 = vmatprep.subr.bf16.mxu0 0
    %521 = vmatpush1.bf16.msra.mxu0 0
    %522 = vmatprep.subr.bf16.mxu0 0
    %523 = vmatpush1.bf16.msra.mxu0 0
    %524 = vmatprep.subr.bf16.mxu0 0
    %525 = vmatpush1.bf16.msra.mxu0 0
    %526 = vmatprep.subr.bf16.mxu0 0
    %527 = vmatpush1.bf16.msra.mxu0 0
    %528 = vmatprep.subr.bf16.mxu0 0
    %529 = vmatpush1.bf16.msra.mxu0 0
    %530 = vmatprep.subr.bf16.mxu0 0
    %531 = vmatpush1.bf16.msra.mxu0 0
    %532 = vmatprep.subr.bf16.mxu0 0
    %533 = vmatpush1.bf16.msra.mxu0 0
    %534 = vmatprep.mubr.bf16.mxu0 0
    %535 = vmatmul.mubr.bf16.gmra.mrb[0].mxu0 %v484
    %v536 = vpop.f32.mrb[0].mxu0
    %v537 = vadd.f32 0.0, %v536
    %v538 = vpop.f32.mrb[0].mxu0
    %v539 = vadd.f32 0.0, %v538
    %v540 = vpop.f32.mrb[0].mxu0
    %v541 = vadd.f32 0.0, %v540
    %v542 = vpop.f32.mrb[0].mxu0
    %v543 = vadd.f32 0.0, %v542
    %544 = vmatprep.mubr.bf16.mxu0 0
    %545 = vmatmul.mubr.bf16.gmra.mrb[0].mxu0 %v487
    %v546 = vpop.f32.mrb[0].mxu0
    %v547 = vadd.f32 0.0, %v546
    %v548 = vpop.f32.mrb[0].mxu0
    %v549 = vadd.f32 0.0, %v548
    %v550 = vpop.f32.mrb[0].mxu0
    %v551 = vadd.f32 0.0, %v550
    %v552 = vpop.f32.mrb[0].mxu0
    %v553 = vadd.f32 0.0, %v552
    %554 = vdwg.mxu0
    %555 = vmatprep.subr.bf16.mxu0 %v451
    %556 = vmatpush1.bf16.msra.mxu0 %v450
    %557 = vmatprep.subr.bf16.mxu0 %v455
    %558 = vmatpush1.bf16.msra.mxu0 %v454
    %559 = vmatprep.subr.bf16.mxu0 %v459
    %560 = vmatpush1.bf16.msra.mxu0 %v458
    %561 = vmatprep.subr.bf16.mxu0 %v463
    %562 = vmatpush1.bf16.msra.mxu0 %v462
    %563 = vmatprep.subr.bf16.mxu0 %v500
    %564 = vmatpush1.bf16.msra.mxu0 %v497
    %565 = vmatprep.subr.bf16.mxu0 0
    %566 = vmatpush1.bf16.msra.mxu0 0
    %567 = vmatprep.subr.bf16.mxu0 0
    %568 = vmatpush1.bf16.msra.mxu0 0
    %569 = vmatprep.subr.bf16.mxu0 0
    %570 = vmatpush1.bf16.msra.mxu0 0
    %571 = vmatprep.subr.bf16.mxu0 0
    %572 = vmatpush1.bf16.msra.mxu0 0
    %573 = vmatprep.subr.bf16.mxu0 0
    %574 = vmatpush1.bf16.msra.mxu0 0
    %575 = vmatprep.subr.bf16.mxu0 0
    %576 = vmatpush1.bf16.msra.mxu0 0
    %577 = vmatprep.subr.bf16.mxu0 0
    %578 = vmatpush1.bf16.msra.mxu0 0
    %579 = vmatprep.subr.bf16.mxu0 0
    %580 = vmatpush1.bf16.msra.mxu0 0
    %581 = vmatprep.subr.bf16.mxu0 0
    %582 = vmatpush1.bf16.msra.mxu0 0
    %583 = vmatprep.subr.bf16.mxu0 0
    %584 = vmatpush1.bf16.msra.mxu0 0
    %585 = vmatprep.subr.bf16.mxu0 0
    %586 = vmatpush1.bf16.msra.mxu0 0
    %587 = vmatprep.mubr.bf16.mxu0 0
    %588 = vmatmul.mubr.bf16.gmra.mrb[0].mxu0 %v484
    %v589 = vpop.f32.mrb[0].mxu0
    %v590 = vadd.f32 0.0, %v589
    %v591 = vpop.f32.mrb[0].mxu0
    %v592 = vadd.f32 0.0, %v591
    %v593 = vpop.f32.mrb[0].mxu0
    %v594 = vadd.f32 0.0, %v593
    %v595 = vpop.f32.mrb[0].mxu0
    %v596 = vadd.f32 0.0, %v595
    %597 = vmatprep.mubr.bf16.mxu0 0
    %598 = vmatmul.mubr.bf16.gmra.mrb[0].mxu0 %v487
    %v599 = vpop.f32.mrb[0].mxu0
    %v600 = vadd.f32 0.0, %v599
    %v601 = vpop.f32.mrb[0].mxu0
    %v602 = vadd.f32 0.0, %v601
    %v603 = vpop.f32.mrb[0].mxu0
    %v604 = vadd.f32 0.0, %v603
    %v605 = vpop.f32.mrb[0].mxu0
    %v606 = vadd.f32 0.0, %v605
    %607 = vdwg.mxu0
    %v608 = vld [vmem:[%s3] sm:$0xff]
    %v609 = vld [vmem:[%s3 + $0x8] sm:$0xff]
    %v610 = vld [vmem:[%s3 + $0x10] sm:$0xff]
    %v611 = vld [vmem:[%s3 + $0x18] sm:$0xff]
    %v612 = vadd.f32 %v537, %v539
    %613 = vadd.xlane.f32.xlu0 %v612
    %v614 = vpop.xlane.xlu0 %613
    %v615 = vadd.f32 %v541, %v543
    %616 = vadd.xlane.f32.xlu0 %v615
    %v617 = vpop.xlane.xlu0 %616
    %v618 = vadd.f32 %v547, %v549
    %619 = vadd.xlane.f32.xlu0 %v618
    %v620 = vpop.xlane.xlu0 %619
    %v621 = vadd.f32 %v551, %v553
    %622 = vadd.xlane.f32.xlu0 %v621
    %v623 = vpop.xlane.xlu0 %622
    %v624 = vrcp.pop 256.0
    %v625 = vmul.f32 %v614, %v624
    %v626 = vmul.f32 %v617, %v624
    %v627 = vmul.f32 %v620, %v624
    %v628 = vmul.f32 %v623, %v624
    %v629 = vmul.f32 %v537, %v537
    %v630 = vmul.f32 %v539, %v539
    %v631 = vmul.f32 %v541, %v541
    %v632 = vmul.f32 %v543, %v543
    %v633 = vmul.f32 %v547, %v547
    %v634 = vmul.f32 %v549, %v549
    %v635 = vmul.f32 %v551, %v551
    %v636 = vmul.f32 %v553, %v553
    %v637 = vadd.f32 %v629, %v630
    %638 = vadd.xlane.f32.xlu0 %v637
    %v639 = vpop.xlane.xlu0 %638
    %v640 = vadd.f32 %v631, %v632
    %641 = vadd.xlane.f32.xlu0 %v640
    %v642 = vpop.xlane.xlu0 %641
    %v643 = vadd.f32 %v633, %v634
    %644 = vadd.xlane.f32.xlu0 %v643
    %v645 = vpop.xlane.xlu0 %644
    %v646 = vadd.f32 %v635, %v636
    %647 = vadd.xlane.f32.xlu0 %v646
    %v648 = vpop.xlane.xlu0 %647
    %v649 = vmul.f32 %v639, %v624
    %v650 = vmul.f32 %v642, %v624
    %v651 = vmul.f32 %v645, %v624
    %v652 = vmul.f32 %v648, %v624
    %v653 = vmul.f32 %v625, %v625
    %v654 = vmul.f32 %v626, %v626
    %v655 = vmul.f32 %v627, %v627
    %v656 = vmul.f32 %v628, %v628
    %v657 = vsub.f32 %v649, %v653
    %v658 = vsub.f32 %v650, %v654
    %v659 = vsub.f32 %v651, %v655
    %v660 = vsub.f32 %v652, %v656
    %v661 = vmax.f32 %v657, 0.0
    %v662 = vmax.f32 %v658, 0.0
    %v663 = vmax.f32 %v659, 0.0
    %v664 = vmax.f32 %v660, 0.0
    %v665 = vadd.f32 %v661, 1e-05
    %v666 = vadd.f32 %v662, 1e-05
    %v667 = vadd.f32 %v663, 1e-05
    %v668 = vadd.f32 %v664, 1e-05
    %v669 = vrsqrt.pop %v665
    %v670 = vrsqrt.pop %v666
    %v671 = vrsqrt.pop %v667
    %v672 = vrsqrt.pop %v668
    %v673 = vsub.f32 %v537, %v625
    %v674 = vsub.f32 %v539, %v625
    %v675 = vsub.f32 %v541, %v626
    %v676 = vsub.f32 %v543, %v626
    %v677 = vsub.f32 %v547, %v627
    %v678 = vsub.f32 %v549, %v627
    %v679 = vsub.f32 %v551, %v628
    %v680 = vsub.f32 %v553, %v628
    %v681 = vmul.f32 %v669, %v608
    %v682 = vmul.f32 %v670, %v609
    %v683 = vmul.f32 %v671, %v610
    %v684 = vmul.f32 %v672, %v611
    %686 = vset.pattern.permute.xlu0 0
    %687 = vperm.xlu0 %686, %v681
    %v688 = vpop.permute.xlu0 %687
    %691 = vset.pattern.permute.xlu0 0
    %692 = vperm.xlu0 %691, %v682
    %v693 = vpop.permute.xlu0 %692
    %696 = vset.pattern.permute.xlu0 0
    %697 = vperm.xlu0 %696, %v683
    %v698 = vpop.permute.xlu0 %697
    %701 = vset.pattern.permute.xlu0 0
    %702 = vperm.xlu0 %701, %v684
    %v703 = vpop.permute.xlu0 %702
    %v705 = vmul.f32 %v673, %v688
    %v706 = vmul.f32 %v674, %v688
    %v707 = vmul.f32 %v675, %v693
    %v708 = vmul.f32 %v676, %v693
    %v709 = vmul.f32 %v677, %v698
    %v710 = vmul.f32 %v678, %v698
    %v711 = vmul.f32 %v679, %v703
    %v712 = vmul.f32 %v680, %v703
    %714 = vset.pattern.permute.xlu0 1
    %715 = vperm.xlu0 %714, %v608
    %v716 = vpop.permute.xlu0 %715
    %719 = vset.pattern.permute.xlu0 1
    %720 = vperm.xlu0 %719, %v609
    %v721 = vpop.permute.xlu0 %720
    %724 = vset.pattern.permute.xlu0 1
    %725 = vperm.xlu0 %724, %v610
    %v726 = vpop.permute.xlu0 %725
    %729 = vset.pattern.permute.xlu0 1
    %730 = vperm.xlu0 %729, %v611
    %v731 = vpop.permute.xlu0 %730
    %v733 = vadd.f32 %v705, %v716
    %v734 = vadd.f32 %v706, %v716
    %v735 = vadd.f32 %v707, %v721
    %v736 = vadd.f32 %v708, %v721
    %v737 = vadd.f32 %v709, %v726
    %v738 = vadd.f32 %v710, %v726
    %v739 = vadd.f32 %v711, %v731
    %v740 = vadd.f32 %v712, %v731
    %v741 = vadd.f32 %v590, %v592
    %742 = vadd.xlane.f32.xlu0 %v741
    %v743 = vpop.xlane.xlu0 %742
    %v744 = vadd.f32 %v594, %v596
    %745 = vadd.xlane.f32.xlu0 %v744
    %v746 = vpop.xlane.xlu0 %745
    %v747 = vadd.f32 %v600, %v602
    %748 = vadd.xlane.f32.xlu0 %v747
    %v749 = vpop.xlane.xlu0 %748
    %v750 = vadd.f32 %v604, %v606
    %751 = vadd.xlane.f32.xlu0 %v750
    %v752 = vpop.xlane.xlu0 %751
    %v753 = vmul.f32 %v743, %v624
    %v754 = vmul.f32 %v746, %v624
    %v755 = vmul.f32 %v749, %v624
    %v756 = vmul.f32 %v752, %v624
    %v757 = vmul.f32 %v590, %v590
    %v758 = vmul.f32 %v592, %v592
    %v759 = vmul.f32 %v594, %v594
    %v760 = vmul.f32 %v596, %v596
    %v761 = vmul.f32 %v600, %v600
    %v762 = vmul.f32 %v602, %v602
    %v763 = vmul.f32 %v604, %v604
    %v764 = vmul.f32 %v606, %v606
    %v765 = vadd.f32 %v757, %v758
    %766 = vadd.xlane.f32.xlu0 %v765
    %v767 = vpop.xlane.xlu0 %766
    %v768 = vadd.f32 %v759, %v760
    %769 = vadd.xlane.f32.xlu0 %v768
    %v770 = vpop.xlane.xlu0 %769
    %v771 = vadd.f32 %v761, %v762
    %772 = vadd.xlane.f32.xlu0 %v771
    %v773 = vpop.xlane.xlu0 %772
    %v774 = vadd.f32 %v763, %v764
    %775 = vadd.xlane.f32.xlu0 %v774
    %v776 = vpop.xlane.xlu0 %775
    %v777 = vmul.f32 %v767, %v624
    %v778 = vmul.f32 %v770, %v624
    %v779 = vmul.f32 %v773, %v624
    %v780 = vmul.f32 %v776, %v624
    %v781 = vmul.f32 %v753, %v753
    %v782 = vmul.f32 %v754, %v754
    %v783 = vmul.f32 %v755, %v755
    %v784 = vmul.f32 %v756, %v756
    %v785 = vsub.f32 %v777, %v781
    %v786 = vsub.f32 %v778, %v782
    %v787 = vsub.f32 %v779, %v783
    %v788 = vsub.f32 %v780, %v784
    %v789 = vmax.f32 %v785, 0.0
    %v790 = vmax.f32 %v786, 0.0
    %v791 = vmax.f32 %v787, 0.0
    %v792 = vmax.f32 %v788, 0.0
    %v793 = vadd.f32 %v789, 1e-05
    %v794 = vadd.f32 %v790, 1e-05
    %v795 = vadd.f32 %v791, 1e-05
    %v796 = vadd.f32 %v792, 1e-05
    %v797 = vrsqrt.pop %v793
    %v798 = vrsqrt.pop %v794
    %v799 = vrsqrt.pop %v795
    %v800 = vrsqrt.pop %v796
    %v801 = vsub.f32 %v590, %v753
    %v802 = vsub.f32 %v592, %v753
    %v803 = vsub.f32 %v594, %v754
    %v804 = vsub.f32 %v596, %v754
    %v805 = vsub.f32 %v600, %v755
    %v806 = vsub.f32 %v602, %v755
    %v807 = vsub.f32 %v604, %v756
    %v808 = vsub.f32 %v606, %v756
    %v809 = vmul.f32 %v797, %v608
    %v810 = vmul.f32 %v798, %v609
    %v811 = vmul.f32 %v799, %v610
    %v812 = vmul.f32 %v800, %v611
    %814 = vset.pattern.permute.xlu0 0
    %815 = vperm.xlu0 %814, %v809
    %v816 = vpop.permute.xlu0 %815
    %819 = vset.pattern.permute.xlu0 0
    %820 = vperm.xlu0 %819, %v810
    %v821 = vpop.permute.xlu0 %820
    %824 = vset.pattern.permute.xlu0 0
    %825 = vperm.xlu0 %824, %v811
    %v826 = vpop.permute.xlu0 %825
    %829 = vset.pattern.permute.xlu0 0
    %830 = vperm.xlu0 %829, %v812
    %v831 = vpop.permute.xlu0 %830
    %v833 = vmul.f32 %v801, %v816
    %v834 = vmul.f32 %v802, %v816
    %v835 = vmul.f32 %v803, %v821
    %v836 = vmul.f32 %v804, %v821
    %v837 = vmul.f32 %v805, %v826
    %v838 = vmul.f32 %v806, %v826
    %v839 = vmul.f32 %v807, %v831
    %v840 = vmul.f32 %v808, %v831
    %v841 = vadd.f32 %v833, %v716
    %v842 = vadd.f32 %v834, %v716
    %v843 = vadd.f32 %v835, %v721
    %v844 = vadd.f32 %v836, %v721
    %v845 = vadd.f32 %v837, %v726
    %v846 = vadd.f32 %v838, %v726
    %v847 = vadd.f32 %v839, %v731
    %v848 = vadd.f32 %v840, %v731
    %vm849 = vcmp.gt.f32.partialorder %v733, 0.0
    %vm850 = vcmp.gt.f32.partialorder %v734, 0.0
    %vm851 = vcmp.gt.f32.partialorder %v841, 0.0
    %vm852 = vcmp.gt.f32.partialorder %v842, 0.0
    %vm853 = vcmp.gt.f32.partialorder %v735, 0.0
    %vm854 = vcmp.gt.f32.partialorder %v736, 0.0
    %vm855 = vcmp.gt.f32.partialorder %v843, 0.0
    %vm856 = vcmp.gt.f32.partialorder %v844, 0.0
    %v857 = vmul.f32 %v733, 0.01
    %v858 = vmul.f32 %v734, 0.01
    %v859 = vmul.f32 %v841, 0.01
    %v860 = vmul.f32 %v842, 0.01
    %v861 = vmul.f32 %v735, 0.01
    %v862 = vmul.f32 %v736, 0.01
    %v863 = vmul.f32 %v843, 0.01
    %v864 = vmul.f32 %v844, 0.01
    %v865 = vsel %vm849, %v733, %v857
    %v866 = vsel %vm850, %v734, %v858
    %v867 = vsel %vm851, %v841, %v859
    %v868 = vsel %vm852, %v842, %v860
    %v869 = vsel %vm853, %v735, %v861
    %v870 = vsel %vm854, %v736, %v862
    %v871 = vsel %vm855, %v843, %v863
    %v872 = vsel %vm856, %v844, %v864
    %873 = vrot.lane.b32.xlu0 %v865, 17
    %v874 = vpop.permute.xlu0 %873
    %875 = vrot.lane.b32.xlu0 %v869, 17
    %v876 = vpop.permute.xlu0 %875
    %877 = vrot.lane.b32.xlu0 %v866, 17
    %v878 = vpop.permute.xlu0 %877
    %879 = vrot.lane.b32.xlu0 %v870, 17
    %v880 = vpop.permute.xlu0 %879
    %881 = vrot.lane.b32.xlu0 %v867, 17
    %v882 = vpop.permute.xlu0 %881
    %883 = vrot.lane.b32.xlu0 %v871, 17
    %v884 = vpop.permute.xlu0 %883
    %885 = vrot.lane.b32.xlu0 %v868, 17
    %v886 = vpop.permute.xlu0 %885
    %887 = vrot.lane.b32.xlu0 %v872, 17
    %v888 = vpop.permute.xlu0 %887
    %v889 = vsel %vm248, %v882, %v886
    %v890 = vsel %vm248, %v884, %v888
    %v891 = vsel %vm248, %v878, %v882
    %v892 = vsel %vm248, %v880, %v884
    %v893 = vsel %vm248, %v874, %v878
    %v894 = vsel %vm248, %v876, %v880
    %v895 = vsel %vm248, %v886, %v874
    %v896 = vsel %vm248, %v888, %v876
    %v897 = vmul.f32 %v895, %v104
    %v898 = vmul.f32 %v893, %v105
    %v899 = vmul.f32 %v891, %v106
    %v900 = vmul.f32 %v889, %v107
    %v901 = vmul.f32 %v896, %v104
    %v902 = vmul.f32 %v894, %v105
    %v903 = vmul.f32 %v892, %v106
    %v904 = vmul.f32 %v890, %v107
    %905 = vst [vmem:[#allocation2] sm:$0xff] %v897
    %906 = vst [vmem:[#allocation2 + $0x8] sm:$0xff] %v898
    %907 = vst [vmem:[#allocation2 + $0x10] sm:$0xff] %v899
    %908 = vst [vmem:[#allocation2 + $0x18] sm:$0xff] %v900
    %909 = vst [vmem:[#allocation2 + $0x20] sm:$0xff] %v901
    %910 = vst [vmem:[#allocation2 + $0x28] sm:$0xff] %v902
    %911 = vst [vmem:[#allocation2 + $0x30] sm:$0xff] %v903
    %912 = vst [vmem:[#allocation2 + $0x38] sm:$0xff] %v904
    %913 = vrot.lane.b32.xlu0 %v865, 16
    %v914 = vpop.permute.xlu0 %913
    %915 = vrot.lane.b32.xlu0 %v869, 16
    %v916 = vpop.permute.xlu0 %915
    %917 = vrot.lane.b32.xlu0 %v866, 16
    %v918 = vpop.permute.xlu0 %917
    %919 = vrot.lane.b32.xlu0 %v870, 16
    %v920 = vpop.permute.xlu0 %919
    %921 = vrot.lane.b32.xlu0 %v867, 16
    %v922 = vpop.permute.xlu0 %921
    %923 = vrot.lane.b32.xlu0 %v871, 16
    %v924 = vpop.permute.xlu0 %923
    %925 = vrot.lane.b32.xlu0 %v868, 16
    %v926 = vpop.permute.xlu0 %925
    %927 = vrot.lane.b32.xlu0 %v872, 16
    %v928 = vpop.permute.xlu0 %927
    %v929 = vsel %vm269, %v922, %v926
    %v930 = vsel %vm269, %v924, %v928
    %v931 = vsel %vm269, %v918, %v922
    %v932 = vsel %vm269, %v920, %v924
    %v933 = vsel %vm269, %v914, %v918
    %v934 = vsel %vm269, %v916, %v920
    %v935 = vsel %vm269, %v926, %v914
    %v936 = vsel %vm269, %v928, %v916
    %v937 = vmul.f32 %v935, %v124
    %v938 = vmul.f32 %v933, %v125
    %v939 = vmul.f32 %v931, %v126
    %v940 = vmul.f32 %v929, %v127
    %v941 = vmul.f32 %v936, %v124
    %v942 = vmul.f32 %v934, %v125
    %v943 = vmul.f32 %v932, %v126
    %v944 = vmul.f32 %v930, %v127
    %945 = vst [vmem:[#allocation2 + $0x40] sm:$0xff] %v937
    %946 = vst [vmem:[#allocation2 + $0x48] sm:$0xff] %v938
    %947 = vst [vmem:[#allocation2 + $0x50] sm:$0xff] %v939
    %948 = vst [vmem:[#allocation2 + $0x58] sm:$0xff] %v940
    %949 = vst [vmem:[#allocation2 + $0x60] sm:$0xff] %v941
    %950 = vst [vmem:[#allocation2 + $0x68] sm:$0xff] %v942
    %951 = vst [vmem:[#allocation2 + $0x70] sm:$0xff] %v943
    %952 = vst [vmem:[#allocation2 + $0x78] sm:$0xff] %v944
    %953 = vrot.lane.b32.xlu0 %v865, 15
    %v954 = vpop.permute.xlu0 %953
    %955 = vrot.lane.b32.xlu0 %v869, 15
    %v956 = vpop.permute.xlu0 %955
    %957 = vrot.lane.b32.xlu0 %v866, 15
    %v958 = vpop.permute.xlu0 %957
    %959 = vrot.lane.b32.xlu0 %v870, 15
    %v960 = vpop.permute.xlu0 %959
    %961 = vrot.lane.b32.xlu0 %v867, 15
    %v962 = vpop.permute.xlu0 %961
    %963 = vrot.lane.b32.xlu0 %v871, 15
    %v964 = vpop.permute.xlu0 %963
    %965 = vrot.lane.b32.xlu0 %v868, 15
    %v966 = vpop.permute.xlu0 %965
    %967 = vrot.lane.b32.xlu0 %v872, 15
    %v968 = vpop.permute.xlu0 %967
    %v969 = vsel %vm290, %v962, %v966
    %v970 = vsel %vm290, %v964, %v968
    %v971 = vsel %vm290, %v958, %v962
    %v972 = vsel %vm290, %v960, %v964
    %v973 = vsel %vm290, %v954, %v958
    %v974 = vsel %vm290, %v956, %v960
    %v975 = vsel %vm290, %v966, %v954
    %v976 = vsel %vm290, %v968, %v956
    %v977 = vmul.f32 %v975, %v148
    %v978 = vmul.f32 %v973, %v149
    %v979 = vmul.f32 %v971, %v150
    %v980 = vmul.f32 %v969, %v151
    %v981 = vmul.f32 %v976, %v148
    %v982 = vmul.f32 %v974, %v149
    %v983 = vmul.f32 %v972, %v150
    %v984 = vmul.f32 %v970, %v151
    %985 = vst [vmem:[#allocation2 + $0x80] sm:$0xff] %v977
    %986 = vst [vmem:[#allocation2 + $0x88] sm:$0xff] %v978
    %987 = vst [vmem:[#allocation2 + $0x90] sm:$0xff] %v979
    %988 = vst [vmem:[#allocation2 + $0x98] sm:$0xff] %v980
    %989 = vst [vmem:[#allocation2 + $0xa0] sm:$0xff] %v981
    %990 = vst [vmem:[#allocation2 + $0xa8] sm:$0xff] %v982
    %991 = vst [vmem:[#allocation2 + $0xb0] sm:$0xff] %v983
    %992 = vst [vmem:[#allocation2 + $0xb8] sm:$0xff] %v984
    %993 = vrot.lane.b32.xlu0 %v865, 1
    %v994 = vpop.permute.xlu0 %993
    %995 = vrot.lane.b32.xlu0 %v869, 1
    %v996 = vpop.permute.xlu0 %995
    %997 = vrot.lane.b32.xlu0 %v866, 1
    %v998 = vpop.permute.xlu0 %997
    %999 = vrot.lane.b32.xlu0 %v870, 1
    %v1000 = vpop.permute.xlu0 %999
    %1001 = vrot.lane.b32.xlu0 %v867, 1
    %v1002 = vpop.permute.xlu0 %1001
    %1003 = vrot.lane.b32.xlu0 %v871, 1
    %v1004 = vpop.permute.xlu0 %1003
    %1005 = vrot.lane.b32.xlu0 %v868, 1
    %v1006 = vpop.permute.xlu0 %1005
    %1007 = vrot.lane.b32.xlu0 %v872, 1
    %v1008 = vpop.permute.xlu0 %1007
    %v1009 = vsel %vm311, %v1002, %v1006
    %v1010 = vsel %vm311, %v1004, %v1008
    %v1011 = vsel %vm311, %v998, %v1002
    %v1012 = vsel %vm311, %v1000, %v1004
    %v1013 = vsel %vm311, %v994, %v998
    %v1014 = vsel %vm311, %v996, %v1000
    %v1015 = vsel %vm311, %v1006, %v994
    %v1016 = vsel %vm311, %v1008, %v996
    %v1017 = vmul.f32 %v1015, %v172
    %v1018 = vmul.f32 %v1013, %v173
    %v1019 = vmul.f32 %v1011, %v174
    %v1020 = vmul.f32 %v1009, %v175
    %v1021 = vmul.f32 %v1016, %v172
    %v1022 = vmul.f32 %v1014, %v173
    %v1023 = vmul.f32 %v1012, %v174
    %v1024 = vmul.f32 %v1010, %v175
    %1025 = vst [vmem:[#allocation2 + $0xc0] sm:$0xff] %v1017
    %1026 = vst [vmem:[#allocation2 + $0xc8] sm:$0xff] %v1018
    %1027 = vst [vmem:[#allocation2 + $0xd0] sm:$0xff] %v1019
    %1028 = vst [vmem:[#allocation2 + $0xd8] sm:$0xff] %v1020
    %1029 = vst [vmem:[#allocation2 + $0xe0] sm:$0xff] %v1021
    %1030 = vst [vmem:[#allocation2 + $0xe8] sm:$0xff] %v1022
    %1031 = vst [vmem:[#allocation2 + $0xf0] sm:$0xff] %v1023
    %1032 = vst [vmem:[#allocation2 + $0xf8] sm:$0xff] %v1024
    %1033 = vst [vmem:[#allocation2 + $0x100] sm:$0xff] %v865
    %1034 = vst [vmem:[#allocation2 + $0x108] sm:$0xff] %v866
    %1035 = vst [vmem:[#allocation2 + $0x110] sm:$0xff] %v867
    %1036 = vst [vmem:[#allocation2 + $0x118] sm:$0xff] %v868
    %1037 = vst [vmem:[#allocation2 + $0x120] sm:$0xff] %v869
    %1038 = vst [vmem:[#allocation2 + $0x128] sm:$0xff] %v870
    %1039 = vst [vmem:[#allocation2 + $0x130] sm:$0xff] %v871
    %1040 = vst [vmem:[#allocation2 + $0x138] sm:$0xff] %v872
    %1041 = vrot.lane.b32.xlu0 %v865, 127
    %v1042 = vpop.permute.xlu0 %1041
    %1043 = vrot.lane.b32.xlu0 %v869, 127
    %v1044 = vpop.permute.xlu0 %1043
    %1045 = vrot.lane.b32.xlu0 %v866, 127
    %v1046 = vpop.permute.xlu0 %1045
    %1047 = vrot.lane.b32.xlu0 %v870, 127
    %v1048 = vpop.permute.xlu0 %1047
    %1049 = vrot.lane.b32.xlu0 %v867, 127
    %v1050 = vpop.permute.xlu0 %1049
    %1051 = vrot.lane.b32.xlu0 %v871, 127
    %v1052 = vpop.permute.xlu0 %1051
    %1053 = vrot.lane.b32.xlu0 %v868, 127
    %v1054 = vpop.permute.xlu0 %1053
    %1055 = vrot.lane.b32.xlu0 %v872, 127
    %v1056 = vpop.permute.xlu0 %1055
    %v1057 = vsel %vm336, %v1050, %v1054
    %v1058 = vsel %vm336, %v1052, %v1056
    %v1059 = vsel %vm336, %v1046, %v1050
    %v1060 = vsel %vm336, %v1048, %v1052
    %v1061 = vsel %vm336, %v1042, %v1046
    %v1062 = vsel %vm336, %v1044, %v1048
    %v1063 = vsel %vm336, %v1054, %v1042
    %v1064 = vsel %vm336, %v1056, %v1044
    %v1065 = vmul.f32 %v1061, %v184
    %v1066 = vmul.f32 %v1059, %v185
    %v1067 = vmul.f32 %v1057, %v186
    %v1068 = vmul.f32 %v1063, %v187
    %v1069 = vmul.f32 %v1062, %v184
    %v1070 = vmul.f32 %v1060, %v185
    %v1071 = vmul.f32 %v1058, %v186
    %v1072 = vmul.f32 %v1064, %v187
    %1073 = vst [vmem:[#allocation2 + $0x140] sm:$0xff] %v1065
    %1074 = vst [vmem:[#allocation2 + $0x148] sm:$0xff] %v1066
    %1075 = vst [vmem:[#allocation2 + $0x150] sm:$0xff] %v1067
    %1076 = vst [vmem:[#allocation2 + $0x158] sm:$0xff] %v1068
    %1077 = vst [vmem:[#allocation2 + $0x160] sm:$0xff] %v1069
    %1078 = vst [vmem:[#allocation2 + $0x168] sm:$0xff] %v1070
    %1079 = vst [vmem:[#allocation2 + $0x170] sm:$0xff] %v1071
    %1080 = vst [vmem:[#allocation2 + $0x178] sm:$0xff] %v1072
    %1081 = vrot.lane.b32.xlu0 %v865, 113
    %v1082 = vpop.permute.xlu0 %1081
    %1083 = vrot.lane.b32.xlu0 %v869, 113
    %v1084 = vpop.permute.xlu0 %1083
    %1085 = vrot.lane.b32.xlu0 %v866, 113
    %v1086 = vpop.permute.xlu0 %1085
    %1087 = vrot.lane.b32.xlu0 %v870, 113
    %v1088 = vpop.permute.xlu0 %1087
    %1089 = vrot.lane.b32.xlu0 %v867, 113
    %v1090 = vpop.permute.xlu0 %1089
    %1091 = vrot.lane.b32.xlu0 %v871, 113
    %v1092 = vpop.permute.xlu0 %1091
    %1093 = vrot.lane.b32.xlu0 %v868, 113
    %v1094 = vpop.permute.xlu0 %1093
    %1095 = vrot.lane.b32.xlu0 %v872, 113
    %v1096 = vpop.permute.xlu0 %1095
    %v1097 = vsel %vm357, %v1090, %v1094
    %v1098 = vsel %vm357, %v1092, %v1096
    %v1099 = vsel %vm357, %v1086, %v1090
    %v1100 = vsel %vm357, %v1088, %v1092
    %v1101 = vsel %vm357, %v1082, %v1086
    %v1102 = vsel %vm357, %v1084, %v1088
    %v1103 = vsel %vm357, %v1094, %v1082
    %v1104 = vsel %vm357, %v1096, %v1084
    %v1105 = vmul.f32 %v1101, %v212
    %v1106 = vmul.f32 %v1099, %v213
    %v1107 = vmul.f32 %v1097, %v214
    %v1108 = vmul.f32 %v1103, %v215
    %v1109 = vmul.f32 %v1102, %v212
    %v1110 = vmul.f32 %v1100, %v213
    %v1111 = vmul.f32 %v1098, %v214
    %v1112 = vmul.f32 %v1104, %v215
    %1113 = vst [vmem:[#allocation2 + $0x180] sm:$0xff] %v1105
    %1114 = vst [vmem:[#allocation2 + $0x188] sm:$0xff] %v1106
    %1115 = vst [vmem:[#allocation2 + $0x190] sm:$0xff] %v1107
    %1116 = vst [vmem:[#allocation2 + $0x198] sm:$0xff] %v1108
    %1117 = vst [vmem:[#allocation2 + $0x1a0] sm:$0xff] %v1109
    %1118 = vst [vmem:[#allocation2 + $0x1a8] sm:$0xff] %v1110
    %1119 = vst [vmem:[#allocation2 + $0x1b0] sm:$0xff] %v1111
    %1120 = vst [vmem:[#allocation2 + $0x1b8] sm:$0xff] %v1112
    %1121 = vrot.lane.b32.xlu0 %v865, 112
    %v1122 = vpop.permute.xlu0 %1121
    %1123 = vrot.lane.b32.xlu0 %v869, 112
    %v1124 = vpop.permute.xlu0 %1123
    %1125 = vrot.lane.b32.xlu0 %v866, 112
    %v1126 = vpop.permute.xlu0 %1125
    %1127 = vrot.lane.b32.xlu0 %v870, 112
    %v1128 = vpop.permute.xlu0 %1127
    %1129 = vrot.lane.b32.xlu0 %v867, 112
    %v1130 = vpop.permute.xlu0 %1129
    %1131 = vrot.lane.b32.xlu0 %v871, 112
    %v1132 = vpop.permute.xlu0 %1131
    %1133 = vrot.lane.b32.xlu0 %v868, 112
    %v1134 = vpop.permute.xlu0 %1133
    %1135 = vrot.lane.b32.xlu0 %v872, 112
    %v1136 = vpop.permute.xlu0 %1135
    %v1137 = vsel %vm378, %v1130, %v1134
    %v1138 = vsel %vm378, %v1132, %v1136
    %v1139 = vsel %vm378, %v1126, %v1130
    %v1140 = vsel %vm378, %v1128, %v1132
    %v1141 = vsel %vm378, %v1122, %v1126
    %v1142 = vsel %vm378, %v1124, %v1128
    %v1143 = vsel %vm378, %v1134, %v1122
    %v1144 = vsel %vm378, %v1136, %v1124
    %v1145 = vmul.f32 %v1141, %v224
    %v1146 = vmul.f32 %v1139, %v225
    %v1147 = vmul.f32 %v1137, %v226
    %v1148 = vmul.f32 %v1143, %v227
    %v1149 = vmul.f32 %v1142, %v224
    %v1150 = vmul.f32 %v1140, %v225
    %v1151 = vmul.f32 %v1138, %v226
    %v1152 = vmul.f32 %v1144, %v227
    %1153 = vst [vmem:[#allocation2 + $0x1c0] sm:$0xff] %v1145
    %1154 = vst [vmem:[#allocation2 + $0x1c8] sm:$0xff] %v1146
    %1155 = vst [vmem:[#allocation2 + $0x1d0] sm:$0xff] %v1147
    %1156 = vst [vmem:[#allocation2 + $0x1d8] sm:$0xff] %v1148
    %1157 = vst [vmem:[#allocation2 + $0x1e0] sm:$0xff] %v1149
    %1158 = vst [vmem:[#allocation2 + $0x1e8] sm:$0xff] %v1150
    %1159 = vst [vmem:[#allocation2 + $0x1f0] sm:$0xff] %v1151
    %1160 = vst [vmem:[#allocation2 + $0x1f8] sm:$0xff] %v1152
    %1161 = vrot.lane.b32.xlu0 %v865, 111
    %v1162 = vpop.permute.xlu0 %1161
    %1163 = vrot.lane.b32.xlu0 %v869, 111
    %v1164 = vpop.permute.xlu0 %1163
    %1165 = vrot.lane.b32.xlu0 %v866, 111
    %v1166 = vpop.permute.xlu0 %1165
    %1167 = vrot.lane.b32.xlu0 %v870, 111
    %v1168 = vpop.permute.xlu0 %1167
    %1169 = vrot.lane.b32.xlu0 %v867, 111
    %v1170 = vpop.permute.xlu0 %1169
    %1171 = vrot.lane.b32.xlu0 %v871, 111
    %v1172 = vpop.permute.xlu0 %1171
    %1173 = vrot.lane.b32.xlu0 %v868, 111
    %v1174 = vpop.permute.xlu0 %1173
    %1175 = vrot.lane.b32.xlu0 %v872, 111
    %v1176 = vpop.permute.xlu0 %1175
    %v1177 = vsel %vm399, %v1170, %v1174
    %v1178 = vsel %vm399, %v1172, %v1176
    %v1179 = vsel %vm399, %v1166, %v1170
    %v1180 = vsel %vm399, %v1168, %v1172
    %v1181 = vsel %vm399, %v1162, %v1166
    %v1182 = vsel %vm399, %v1164, %v1168
    %v1183 = vsel %vm399, %v1174, %v1162
    %v1184 = vsel %vm399, %v1176, %v1164
    %v1185 = vmul.f32 %v1181, %v236
    %v1186 = vmul.f32 %v1179, %v237
    %v1187 = vmul.f32 %v1177, %v238
    %v1188 = vmul.f32 %v1183, %v239
    %v1189 = vmul.f32 %v1182, %v236
    %v1190 = vmul.f32 %v1180, %v237
    %v1191 = vmul.f32 %v1178, %v238
    %v1192 = vmul.f32 %v1184, %v239
    %1193 = vst [vmem:[#allocation2 + $0x200] sm:$0xff] %v1185
    %1194 = vst [vmem:[#allocation2 + $0x208] sm:$0xff] %v1186
    %1195 = vst [vmem:[#allocation2 + $0x210] sm:$0xff] %v1187
    %1196 = vst [vmem:[#allocation2 + $0x218] sm:$0xff] %v1188
    %1197 = vst [vmem:[#allocation2 + $0x220] sm:$0xff] %v1189
    %1198 = vst [vmem:[#allocation2 + $0x228] sm:$0xff] %v1190
    %1199 = vst [vmem:[#allocation2 + $0x230] sm:$0xff] %v1191
    %1200 = vst [vmem:[#allocation2 + $0x238] sm:$0xff] %v1192
    %v1201 = vld [vmem:[#allocation2] sm:$0xff]
    %v1202 = vld [vmem:[#allocation2 + $0x8] sm:$0xff]
    %v1203 = vld [vmem:[#allocation2 + $0x10] sm:$0xff]
    %v1204 = vld [vmem:[#allocation2 + $0x18] sm:$0xff]
    %v1205 = vld [vmem:[#allocation2 + $0x20] sm:$0xff]
    %v1206 = vld [vmem:[#allocation2 + $0x28] sm:$0xff]
    %v1207 = vld [vmem:[#allocation2 + $0x30] sm:$0xff]
    %v1208 = vld [vmem:[#allocation2 + $0x38] sm:$0xff]
    %v1209 = vld [vmem:[#allocation2 + $0x40] sm:$0xff]
    %v1210 = vld [vmem:[#allocation2 + $0x48] sm:$0xff]
    %v1211 = vld [vmem:[#allocation2 + $0x50] sm:$0xff]
    %v1212 = vld [vmem:[#allocation2 + $0x58] sm:$0xff]
    %v1213 = vld [vmem:[#allocation2 + $0x60] sm:$0xff]
    %v1214 = vld [vmem:[#allocation2 + $0x68] sm:$0xff]
    %v1215 = vld [vmem:[#allocation2 + $0x70] sm:$0xff]
    %v1216 = vld [vmem:[#allocation2 + $0x78] sm:$0xff]
    %v1217 = vld [vmem:[#allocation2 + $0x80] sm:$0xff]
    %v1218 = vld [vmem:[#allocation2 + $0x88] sm:$0xff]
    %v1219 = vld [vmem:[#allocation2 + $0x90] sm:$0xff]
    %v1220 = vld [vmem:[#allocation2 + $0x98] sm:$0xff]
    %v1221 = vld [vmem:[#allocation2 + $0xa0] sm:$0xff]
    %v1222 = vld [vmem:[#allocation2 + $0xa8] sm:$0xff]
    %v1223 = vld [vmem:[#allocation2 + $0xb0] sm:$0xff]
    %v1224 = vld [vmem:[#allocation2 + $0xb8] sm:$0xff]
    %v1225 = vld [vmem:[#allocation2 + $0xc0] sm:$0xff]
    %v1226 = vld [vmem:[#allocation2 + $0xc8] sm:$0xff]
    %v1227 = vld [vmem:[#allocation2 + $0xd0] sm:$0xff]
    %v1228 = vld [vmem:[#allocation2 + $0xd8] sm:$0xff]
    %v1229 = vld [vmem:[#allocation2 + $0xe0] sm:$0xff]
    %v1230 = vld [vmem:[#allocation2 + $0xe8] sm:$0xff]
    %v1231 = vld [vmem:[#allocation2 + $0xf0] sm:$0xff]
    %v1232 = vld [vmem:[#allocation2 + $0xf8] sm:$0xff]
    %v1233 = vld [vmem:[#allocation2 + $0x100] sm:$0xff]
    %v1234 = vld [vmem:[#allocation2 + $0x108] sm:$0xff]
    %v1235 = vld [vmem:[#allocation2 + $0x110] sm:$0xff]
    %v1236 = vld [vmem:[#allocation2 + $0x118] sm:$0xff]
    %v1237 = vld [vmem:[#allocation2 + $0x120] sm:$0xff]
    %v1238 = vld [vmem:[#allocation2 + $0x128] sm:$0xff]
    %v1239 = vld [vmem:[#allocation2 + $0x130] sm:$0xff]
    %v1240 = vld [vmem:[#allocation2 + $0x138] sm:$0xff]
    %v1241 = vld [vmem:[#allocation2 + $0x140] sm:$0xff]
    %v1242 = vld [vmem:[#allocation2 + $0x148] sm:$0xff]
    %v1243 = vld [vmem:[#allocation2 + $0x150] sm:$0xff]
    %v1244 = vld [vmem:[#allocation2 + $0x158] sm:$0xff]
    %v1245 = vld [vmem:[#allocation2 + $0x160] sm:$0xff]
    %v1246 = vld [vmem:[#allocation2 + $0x168] sm:$0xff]
    %v1247 = vld [vmem:[#allocation2 + $0x170] sm:$0xff]
    %v1248 = vld [vmem:[#allocation2 + $0x178] sm:$0xff]
    %v1249 = vld [vmem:[#allocation2 + $0x180] sm:$0xff]
    %v1250 = vld [vmem:[#allocation2 + $0x188] sm:$0xff]
    %v1251 = vld [vmem:[#allocation2 + $0x190] sm:$0xff]
    %v1252 = vld [vmem:[#allocation2 + $0x198] sm:$0xff]
    %v1253 = vld [vmem:[#allocation2 + $0x1a0] sm:$0xff]
    %v1254 = vld [vmem:[#allocation2 + $0x1a8] sm:$0xff]
    %v1255 = vld [vmem:[#allocation2 + $0x1b0] sm:$0xff]
    %v1256 = vld [vmem:[#allocation2 + $0x1b8] sm:$0xff]
    %v1257 = vld [vmem:[#allocation2 + $0x1c0] sm:$0xff]
    %v1258 = vld [vmem:[#allocation2 + $0x1c8] sm:$0xff]
    %v1259 = vld [vmem:[#allocation2 + $0x1d0] sm:$0xff]
    %v1260 = vld [vmem:[#allocation2 + $0x1d8] sm:$0xff]
    %v1261 = vld [vmem:[#allocation2 + $0x1e0] sm:$0xff]
    %v1262 = vld [vmem:[#allocation2 + $0x1e8] sm:$0xff]
    %v1263 = vld [vmem:[#allocation2 + $0x1f0] sm:$0xff]
    %v1264 = vld [vmem:[#allocation2 + $0x1f8] sm:$0xff]
    %v1265 = vld [vmem:[#allocation2 + $0x200] sm:$0xff]
    %v1266 = vld [vmem:[#allocation2 + $0x208] sm:$0xff]
    %v1267 = vld [vmem:[#allocation2 + $0x210] sm:$0xff]
    %v1268 = vld [vmem:[#allocation2 + $0x218] sm:$0xff]
    %v1269 = vld [vmem:[#allocation2 + $0x220] sm:$0xff]
    %v1270 = vld [vmem:[#allocation2 + $0x228] sm:$0xff]
    %v1271 = vld [vmem:[#allocation2 + $0x230] sm:$0xff]
    %v1272 = vld [vmem:[#allocation2 + $0x238] sm:$0xff]
    %v1273 = vpack.c.bf16 %v1205, %v1201
    %v1274 = vpack.c.bf16 %v1206, %v1202
    %v1275 = vpack.c.bf16 %v1207, %v1203
    %v1276 = vpack.c.bf16 %v1208, %v1204
    %v1277 = vpack.c.bf16 %v1213, %v1209
    %v1278 = vpack.c.bf16 %v1214, %v1210
    %v1279 = vpack.c.bf16 %v1215, %v1211
    %v1280 = vpack.c.bf16 %v1216, %v1212
    %v1281 = vpack.c.bf16 %v1221, %v1217
    %v1282 = vpack.c.bf16 %v1222, %v1218
    %v1283 = vpack.c.bf16 %v1223, %v1219
    %v1284 = vpack.c.bf16 %v1224, %v1220
    %v1285 = vpack.c.bf16 %v1229, %v1225
    %v1286 = vpack.c.bf16 %v1230, %v1226
    %v1287 = vpack.c.bf16 %v1231, %v1227
    %v1288 = vpack.c.bf16 %v1232, %v1228
    %v1289 = vpack.c.bf16 %v1237, %v1233
    %v1290 = vpack.c.bf16 %v1238, %v1234
    %v1291 = vpack.c.bf16 %v1239, %v1235
    %v1292 = vpack.c.bf16 %v1240, %v1236
    %v1293 = vpack.c.bf16 %v1245, %v1241
    %v1294 = vpack.c.bf16 %v1246, %v1242
    %v1295 = vpack.c.bf16 %v1247, %v1243
    %v1296 = vpack.c.bf16 %v1248, %v1244
    %v1297 = vpack.c.bf16 %v1253, %v1249
    %v1298 = vpack.c.bf16 %v1254, %v1250
    %v1299 = vpack.c.bf16 %v1255, %v1251
    %v1300 = vpack.c.bf16 %v1256, %v1252
    %v1301 = vpack.c.bf16 %v1261, %v1257
    %v1302 = vpack.c.bf16 %v1262, %v1258
    %v1303 = vpack.c.bf16 %v1263, %v1259
    %v1304 = vpack.c.bf16 %v1264, %v1260
    %v1305 = vpack.c.bf16 %v1269, %v1265
    %v1306 = vpack.c.bf16 %v1270, %v1266
    %v1307 = vpack.c.bf16 %v1271, %v1267
    %v1308 = vpack.c.bf16 %v1272, %v1268
    %v1309 = vld [vmem:[#allocation6] sm:$0xff]
    %v1310 = vld [vmem:[#allocation6 + $0x8] sm:$0xff]
    %v1313 = vunpack.c.l.b16 %v1309
    %v1314 = vunpack.c.h.b16 %v1309
    %v1315 = vunpack.c.l.b16 %v1310
    %v1316 = vunpack.c.h.b16 %v1310
    %v1317 = vpack.c.b16 %v1315, %v1313
    %v1318 = vpack.c.b16 %v1316, %v1314
    %vm1320 = vcmask 130048
    %v1322 = vsel %vm1320, %v1318, 0
    %1324 = vmatprep.subr.bf16.mxu0 %v1274
    %1325 = vmatpush1.bf16.msra.mxu0 %v1273
    %1326 = vmatprep.subr.bf16.mxu0 %v1278
    %1327 = vmatpush1.bf16.msra.mxu0 %v1277
    %1328 = vmatprep.subr.bf16.mxu0 %v1282
    %1329 = vmatpush1.bf16.msra.mxu0 %v1281
    %1330 = vmatprep.subr.bf16.mxu0 %v1286
    %1331 = vmatpush1.bf16.msra.mxu0 %v1285
    %1332 = vmatprep.subr.bf16.mxu0 %v1290
    %1333 = vmatpush1.bf16.msra.mxu0 %v1289
    %1334 = vmatprep.subr.bf16.mxu0 %v1294
    %1335 = vmatpush1.bf16.msra.mxu0 %v1293
    %1336 = vmatprep.subr.bf16.mxu0 %v1298
    %1337 = vmatpush1.bf16.msra.mxu0 %v1297
    %1338 = vmatprep.subr.bf16.mxu0 %v1302
    %1339 = vmatpush1.bf16.msra.mxu0 %v1301
    %1340 = vmatprep.subr.bf16.mxu0 %v1306
    %1341 = vmatpush1.bf16.msra.mxu0 %v1305
    %1342 = vmatprep.subr.bf16.mxu0 0
    %1343 = vmatpush1.bf16.msra.mxu0 0
    %1344 = vmatprep.subr.bf16.mxu0 0
    %1345 = vmatpush1.bf16.msra.mxu0 0
    %1346 = vmatprep.subr.bf16.mxu0 0
    %1347 = vmatpush1.bf16.msra.mxu0 0
    %1348 = vmatprep.subr.bf16.mxu0 0
    %1349 = vmatpush1.bf16.msra.mxu0 0
    %1350 = vmatprep.subr.bf16.mxu0 0
    %1351 = vmatpush1.bf16.msra.mxu0 0
    %1352 = vmatprep.subr.bf16.mxu0 0
    %1353 = vmatpush1.bf16.msra.mxu0 0
    %1354 = vmatprep.subr.bf16.mxu0 0
    %1355 = vmatpush1.bf16.msra.mxu0 0
    %1356 = vmatprep.mubr.bf16.mxu0 %v1322
    %1357 = vmatmul.mubr.bf16.gmra.mrb[0].mxu0 %v1317
    %v1358 = vpop.f32.mrb[0].mxu0
    %v1359 = vadd.f32 0.0, %v1358
    %v1360 = vpop.f32.mrb[0].mxu0
    %v1361 = vadd.f32 0.0, %v1360
    %v1362 = vpop.f32.mrb[0].mxu0
    %v1363 = vadd.f32 0.0, %v1362
    %v1364 = vpop.f32.mrb[0].mxu0
    %v1365 = vadd.f32 0.0, %v1364
    %1366 = vdwg.mxu0
    %1367 = vmatprep.subr.bf16.mxu0 %v1276
    %1368 = vmatpush1.bf16.msra.mxu0 %v1275
    %1369 = vmatprep.subr.bf16.mxu0 %v1280
    %1370 = vmatpush1.bf16.msra.mxu0 %v1279
    %1371 = vmatprep.subr.bf16.mxu0 %v1284
    %1372 = vmatpush1.bf16.msra.mxu0 %v1283
    %1373 = vmatprep.subr.bf16.mxu0 %v1288
    %1374 = vmatpush1.bf16.msra.mxu0 %v1287
    %1375 = vmatprep.subr.bf16.mxu0 %v1292
    %1376 = vmatpush1.bf16.msra.mxu0 %v1291
    %1377 = vmatprep.subr.bf16.mxu0 %v1296
    %1378 = vmatpush1.bf16.msra.mxu0 %v1295
    %1379 = vmatprep.subr.bf16.mxu0 %v1300
    %1380 = vmatpush1.bf16.msra.mxu0 %v1299
    %1381 = vmatprep.subr.bf16.mxu0 %v1304
    %1382 = vmatpush1.bf16.msra.mxu0 %v1303
    %1383 = vmatprep.subr.bf16.mxu0 %v1308
    %1384 = vmatpush1.bf16.msra.mxu0 %v1307
    %1385 = vmatprep.subr.bf16.mxu0 0
    %1386 = vmatpush1.bf16.msra.mxu0 0
    %1387 = vmatprep.subr.bf16.mxu0 0
    %1388 = vmatpush1.bf16.msra.mxu0 0
    %1389 = vmatprep.subr.bf16.mxu0 0
    %1390 = vmatpush1.bf16.msra.mxu0 0
    %1391 = vmatprep.subr.bf16.mxu0 0
    %1392 = vmatpush1.bf16.msra.mxu0 0
    %1393 = vmatprep.subr.bf16.mxu0 0
    %1394 = vmatpush1.bf16.msra.mxu0 0
    %1395 = vmatprep.subr.bf16.mxu0 0
    %1396 = vmatpush1.bf16.msra.mxu0 0
    %1397 = vmatprep.subr.bf16.mxu0 0
    %1398 = vmatpush1.bf16.msra.mxu0 0
    %1399 = vmatprep.mubr.bf16.mxu0 %v1322
    %1400 = vmatmul.mubr.bf16.gmra.mrb[0].mxu0 %v1317
    %v1401 = vpop.f32.mrb[0].mxu0
    %v1402 = vadd.f32 0.0, %v1401
    %v1403 = vpop.f32.mrb[0].mxu0
    %v1404 = vadd.f32 0.0, %v1403
    %v1405 = vpop.f32.mrb[0].mxu0
    %v1406 = vadd.f32 0.0, %v1405
    %v1407 = vpop.f32.mrb[0].mxu0
    %v1408 = vadd.f32 0.0, %v1407
    %1409 = vdwg.mxu0
    %v1410 = vld [vmem:[%s3] sm:$0xff]
    %v1411 = vld [vmem:[%s3 + $0x8] sm:$0xff]
    %v1412 = vadd.f32 %v1359, %v1361
    %1413 = vadd.xlane.f32.xlu0 %v1412
    %v1414 = vpop.xlane.xlu0 %1413
    %v1415 = vadd.f32 %v1363, %v1365
    %1416 = vadd.xlane.f32.xlu0 %v1415
    %v1417 = vpop.xlane.xlu0 %1416
    %v1418 = vmul.f32 %v1414, %v624
    %v1419 = vmul.f32 %v1417, %v624
    %v1420 = vmul.f32 %v1359, %v1359
    %v1421 = vmul.f32 %v1361, %v1361
    %v1422 = vmul.f32 %v1363, %v1363
    %v1423 = vmul.f32 %v1365, %v1365
    %v1424 = vadd.f32 %v1420, %v1421
    %1425 = vadd.xlane.f32.xlu0 %v1424
    %v1426 = vpop.xlane.xlu0 %1425
    %v1427 = vadd.f32 %v1422, %v1423
    %1428 = vadd.xlane.f32.xlu0 %v1427
    %v1429 = vpop.xlane.xlu0 %1428
    %v1430 = vmul.f32 %v1426, %v624
    %v1431 = vmul.f32 %v1429, %v624
    %v1432 = vmul.f32 %v1418, %v1418
    %v1433 = vmul.f32 %v1419, %v1419
    %v1434 = vsub.f32 %v1430, %v1432
    %v1435 = vsub.f32 %v1431, %v1433
    %v1436 = vmax.f32 %v1434, 0.0
    %v1437 = vmax.f32 %v1435, 0.0
    %v1438 = vadd.f32 %v1436, 1e-05
    %v1439 = vadd.f32 %v1437, 1e-05
    %v1440 = vrsqrt.pop %v1438
    %v1441 = vrsqrt.pop %v1439
    %v1442 = vsub.f32 %v1359, %v1418
    %v1443 = vsub.f32 %v1361, %v1418
    %v1444 = vsub.f32 %v1363, %v1419
    %v1445 = vsub.f32 %v1365, %v1419
    %v1446 = vmul.f32 %v1440, %v1410
    %v1447 = vmul.f32 %v1441, %v1411
    %1449 = vset.pattern.permute.xlu0 2
    %1450 = vperm.xlu0 %1449, %v1446
    %v1451 = vpop.permute.xlu0 %1450
    %1454 = vset.pattern.permute.xlu0 2
    %1455 = vperm.xlu0 %1454, %v1447
    %v1456 = vpop.permute.xlu0 %1455
    %v1458 = vmul.f32 %v1442, %v1451
    %v1459 = vmul.f32 %v1443, %v1451
    %v1460 = vmul.f32 %v1444, %v1456
    %v1461 = vmul.f32 %v1445, %v1456
    %1463 = vset.pattern.permute.xlu0 3
    %1464 = vperm.xlu0 %1463, %v1410
    %v1465 = vpop.permute.xlu0 %1464
    %1468 = vset.pattern.permute.xlu0 3
    %1469 = vperm.xlu0 %1468, %v1411
    %v1470 = vpop.permute.xlu0 %1469
    %v1472 = vadd.f32 %v1458, %v1465
    %v1473 = vadd.f32 %v1459, %v1465
    %v1474 = vadd.f32 %v1460, %v1470
    %v1475 = vadd.f32 %v1461, %v1470
    %v1476 = vadd.f32 %v1402, %v1404
    %1477 = vadd.xlane.f32.xlu0 %v1476
    %v1478 = vpop.xlane.xlu0 %1477
    %v1479 = vadd.f32 %v1406, %v1408
    %1480 = vadd.xlane.f32.xlu0 %v1479
    %v1481 = vpop.xlane.xlu0 %1480
    %v1482 = vmul.f32 %v1478, %v624
    %v1483 = vmul.f32 %v1481, %v624
    %v1484 = vmul.f32 %v1402, %v1402
    %v1485 = vmul.f32 %v1404, %v1404
    %v1486 = vmul.f32 %v1406, %v1406
    %v1487 = vmul.f32 %v1408, %v1408
    %v1488 = vadd.f32 %v1484, %v1485
    %1489 = vadd.xlane.f32.xlu0 %v1488
    %v1490 = vpop.xlane.xlu0 %1489
    %v1491 = vadd.f32 %v1486, %v1487
    %1492 = vadd.xlane.f32.xlu0 %v1491
    %v1493 = vpop.xlane.xlu0 %1492
    %v1494 = vmul.f32 %v1490, %v624
    %v1495 = vmul.f32 %v1493, %v624
    %v1496 = vmul.f32 %v1482, %v1482
    %v1497 = vmul.f32 %v1483, %v1483
    %v1498 = vsub.f32 %v1494, %v1496
    %v1499 = vsub.f32 %v1495, %v1497
    %v1500 = vmax.f32 %v1498, 0.0
    %v1501 = vmax.f32 %v1499, 0.0
    %v1502 = vadd.f32 %v1500, 1e-05
    %v1503 = vadd.f32 %v1501, 1e-05
    %v1504 = vrsqrt.pop %v1502
    %v1505 = vrsqrt.pop %v1503
    %v1506 = vsub.f32 %v1402, %v1482
    %v1507 = vsub.f32 %v1404, %v1482
    %v1508 = vsub.f32 %v1406, %v1483
    %v1509 = vsub.f32 %v1408, %v1483
    %v1510 = vmul.f32 %v1504, %v1410
    %v1511 = vmul.f32 %v1505, %v1411
    %1513 = vset.pattern.permute.xlu0 2
    %1514 = vperm.xlu0 %1513, %v1510
    %v1515 = vpop.permute.xlu0 %1514
    %1518 = vset.pattern.permute.xlu0 2
    %1519 = vperm.xlu0 %1518, %v1511
    %v1520 = vpop.permute.xlu0 %1519
    %v1522 = vmul.f32 %v1506, %v1515
    %v1523 = vmul.f32 %v1507, %v1515
    %v1524 = vmul.f32 %v1508, %v1520
    %v1525 = vmul.f32 %v1509, %v1520
    %v1526 = vadd.f32 %v1522, %v1465
    %v1527 = vadd.f32 %v1523, %v1465
    %v1528 = vadd.f32 %v1524, %v1470
    %v1529 = vadd.f32 %v1525, %v1470
    %v1530 = vadd.f32 %v1472, %v737
    %v1531 = vadd.f32 %v1473, %v738
    %v1532 = vadd.f32 %v1526, %v845
    %v1533 = vadd.f32 %v1527, %v846
    %v1534 = vadd.f32 %v1474, %v739
    %v1535 = vadd.f32 %v1475, %v740
    %v1536 = vadd.f32 %v1528, %v847
    %v1537 = vadd.f32 %v1529, %v848
    %vm1538 = vcmp.gt.f32.partialorder %v1530, 0.0
    %vm1539 = vcmp.gt.f32.partialorder %v1531, 0.0
    %vm1540 = vcmp.gt.f32.partialorder %v1532, 0.0
    %vm1541 = vcmp.gt.f32.partialorder %v1533, 0.0
    %vm1542 = vcmp.gt.f32.partialorder %v1534, 0.0
    %vm1543 = vcmp.gt.f32.partialorder %v1535, 0.0
    %vm1544 = vcmp.gt.f32.partialorder %v1536, 0.0
    %vm1545 = vcmp.gt.f32.partialorder %v1537, 0.0
    %v1546 = vmul.f32 %v1530, 0.01
    %v1547 = vmul.f32 %v1531, 0.01
    %v1548 = vmul.f32 %v1532, 0.01
    %v1549 = vmul.f32 %v1533, 0.01
    %v1550 = vmul.f32 %v1534, 0.01
    %v1551 = vmul.f32 %v1535, 0.01
    %v1552 = vmul.f32 %v1536, 0.01
    %v1553 = vmul.f32 %v1537, 0.01
    %v1554 = vsel %vm1538, %v1530, %v1546
    %v1555 = vsel %vm1539, %v1531, %v1547
    %v1556 = vsel %vm1540, %v1532, %v1548
    %v1557 = vsel %vm1541, %v1533, %v1549
    %v1558 = vsel %vm1542, %v1534, %v1550
    %v1559 = vsel %vm1543, %v1535, %v1551
    %v1560 = vsel %vm1544, %v1536, %v1552
    %v1561 = vsel %vm1545, %v1537, %v1553
    %1562 = vst [vmem:[#allocation8] sm:$0xff] %v1554
    %1563 = vst [vmem:[#allocation8 + $0x8] sm:$0xff] %v1555
    %1564 = vst [vmem:[#allocation8 + $0x10] sm:$0xff] %v1556
    %1565 = vst [vmem:[#allocation8 + $0x18] sm:$0xff] %v1557
    %1566 = vst [vmem:[#allocation8 + $0x20] sm:$0xff] %v1558
    %1567 = vst [vmem:[#allocation8 + $0x28] sm:$0xff] %v1559
    %1568 = vst [vmem:[#allocation8 + $0x30] sm:$0xff] %v1560
    %1569 = vst [vmem:[#allocation8 + $0x38] sm:$0xff] %v1561
    // Predicated region
    $region26: #{tpu_custom_call.1} parent=1 // pred_check
      _
    $region27: #{tpu_custom_call.1} parent=1 // pred_check_branch
      %1571 = sbr.rel (0) target = $region29
    $region28: #{tpu_custom_call.1} parent=1 // pred_region
      %s1573 = ssub.s32 1024, 1024
      %1574 = vsyncadd [#allocation5], %s1573
      %s1575 = sshll.u32 [#allocation8], 4
      %s1576 = int_to_ptr.vmem [resolvable:$true] %s1575
      %1581 = dma.vmem_to_hbm [thread:$0]  %s1576, 1024, %s4, [#allocation5], 512, 512, 32
    $region29: #{tpu_custom_call.1} parent=1 // pred_fallthru
      _
    // Predicated region
    $region30: #{tpu_custom_call.1} parent=1 // pred_check
      _
    $region31: #{tpu_custom_call.1} parent=1 // pred_check_branch
      %1583 = sbr.rel (0) target = $region33
    $region32: #{tpu_custom_call.1} parent=1 // pred_region
      %1584 = dma.done [#allocation5], 1024
    $region33: #{tpu_custom_call.1} parent=1 // pred_fallthru
      _
    %1585 = vsyncpa [#allocation4], 1
    %1586 = vsyncpa [#allocation7], 1
    %1587 = vsyncpa [#allocation5], 1

</llo_original>
